<compile_context>
chip_gen: v6e
topology: v6e:2x2x1
jax: 0.10.0
libtpu: 0.0.40
codegen_flags: <defaults>
</compile_context>

<pallas_src>
import functools

import jax
import jax.numpy as jnp
from jax.experimental import pallas as pl
from jax.experimental.pallas import tpu as pltpu

# Review item (v6e/v7x): feed the K2 matmul in bf16 for 2x MXU throughput.
# Off by default to preserve float32 reference semantics at these toy sizes.
USE_BF16_MATMUL = False


# -----------------------------------------------------------------------------
# Helpers
# -----------------------------------------------------------------------------
def _bn_affine(bn, eps=1e-5):
    scale = bn["gamma"] * jax.lax.rsqrt(bn["var"] + eps)
    shift = bn["beta"] - bn["mean"] * scale
    return scale, shift


def _hw_tile(hw):
    # Review: bigger tiles amortize the ~0.35us per-grid-step overhead; use the
    # whole H*W extent when small, else the largest 128-multiple tile dividing it.
    if hw <= 8192:
        return hw
    for t in (8192, 4096, 2048, 1024, 512, 256, 128):
        if hw % t == 0:
            return t
    return hw


def _cparams(semantics, block_bytes):
    # Explicit scoped-VMEM limit (review: v5e defaults to 16 MiB scoped; v7x has
    # only 64 MiB physical).  Blocks are double-buffered by the pipeline.
    limit = int(min(48 * 2**20, max(32 * 2**20, 8 * block_bytes)))
    return pltpu.CompilerParams(dimension_semantics=semantics,
                                vmem_limit_bytes=limit)


# -----------------------------------------------------------------------------
# Kernel 1: AxialDW + BN affine + cosine-Gram / triu / threshold count, fused.
# Block layout: (C, H*W) with H*W in lanes (lane-dense).
# -----------------------------------------------------------------------------
def _axial_bn_cosine_kernel(x_ref, wh_ref, ww_ref, b_ref, s_ref, t_ref,
                            wpos_ref, skip_ref, cnt_ref, *, W, pad, threshold):
    C, HW = x_ref.shape[1], x_ref.shape[2]
    x = x_ref[0]                                   # (C, HW)
    wh = wh_ref[...]                               # (C, 7) dw_h taps
    ww = ww_ref[...]                               # (C, 7) dw_w taps
    wpos = wpos_ref[...]                           # (1, HW) int32: w = p mod W

    # Zero halo built in VMEM (no HBM jnp.pad round-trip).  `pad` is a multiple
    # of 128, so the concatenation is lane-aligned.
    zeros = jnp.zeros((C, pad), dtype=x.dtype)
    xp = jnp.concatenate([zeros, x, zeros], axis=1)   # (C, HW + 2*pad)

    acc = x + b_ref[...]                           # residual + (bias_h + bias_w)

    # dw_h taps: a lane shift by (k-3)*W of the flattened image is exactly the
    # zero-padded H-shift (row h+k-3 is outside [0,H) iff the shifted index
    # falls in the zero halo), so no extra mask is needed.
    for k in range(7):
        sft = (k - 3) * W
        acc = acc + wh[:, k:k + 1] * xp[:, pad + sft: pad + sft + HW]

    # dw_w taps: lane shift by k-3, masking positions that crossed a row.
    for k in range(7):
        sft = k - 3
        tap = xp[:, pad + sft: pad + sft + HW]
        if sft > 0:
            tap = jnp.where(wpos < W - sft, tap, 0.0)
        elif sft < 0:
            tap = jnp.where(wpos >= -sft, tap, 0.0)
        acc = acc + ww[:, k:k + 1] * tap

    skip = acc * s_ref[...] + t_ref[...]           # fused BatchNorm affine
    skip_ref[0] = skip

    # Cosine-similarity Gram over HW; normalise AFTER the Gram (rsqrt -> EUP).
    gram = jax.lax.dot_general(skip, skip, (((1,), (1,)), ((), ())),
                               preferred_element_type=jnp.float32)   # (C, C)
    row = jax.lax.broadcasted_iota(jnp.int32, (C, C), 0)
    col = jax.lax.broadcasted_iota(jnp.int32, (C, C), 1)
    diag = jnp.where(row == col, gram, 0.0)
    sq_r = jnp.sum(diag, axis=1, keepdims=True)        # (C, 1) = ||f_i||^2
    sq_c = jnp.sum(diag, axis=0, keepdims=True)        # (1, C) = ||f_j||^2
    inv_r = jax.lax.rsqrt(jnp.maximum(sq_r, 1e-24))    # 1 / max(||f||, 1e-12)
    inv_c = jax.lax.rsqrt(jnp.maximum(sq_c, 1e-24))
    cos = gram * inv_r * inv_c
    upper = jnp.where(col > row, cos, 0.0)             # triu(diagonal=1)
    # torch thresholds the WHOLE matrix, so the zeroed lower-triangle/diagonal
    # entries (< threshold) are counted too -- matches the reference exactly.
    cnt = jnp.sum((upper < threshold).astype(jnp.float32), axis=0,
                  keepdims=True)                       # (1, C)
    cnt_ref[0] = cnt


def axial_bn_cosine(x_flat, wh, bh, ww, bw, scale, shift, *, W, threshold):
    B, C, HW = x_flat.shape
    pad = ((3 * W + 127) // 128) * 128                 # lane-aligned halo width
    kernel = functools.partial(_axial_bn_cosine_kernel, W=W, pad=pad,
                               threshold=threshold)
    wpos = (jnp.arange(HW, dtype=jnp.int32) % W).reshape(1, HW)
    blk_bytes = 4 * (3 * C * HW + C * 2 * pad + 2 * C * 7 + 3 * C + HW)
    skip, cnt = pl.pallas_call(
        kernel,
        out_shape=(jax.ShapeDtypeStruct((B, C, HW), jnp.float32),
                   jax.ShapeDtypeStruct((B, 1, C), jnp.float32)),
        grid=(B,),
        in_specs=[
            pl.BlockSpec((1, C, HW), lambda b: (b, 0, 0)),
            pl.BlockSpec((C, 7), lambda b: (0, 0)),
            pl.BlockSpec((C, 7), lambda b: (0, 0)),
            pl.BlockSpec((C, 1), lambda b: (0, 0)),
            pl.BlockSpec((C, 1), lambda b: (0, 0)),
            pl.BlockSpec((C, 1), lambda b: (0, 0)),
            pl.BlockSpec((1, HW), lambda b: (0, 0)),
        ],
        out_specs=(pl.BlockSpec((1, C, HW), lambda b: (b, 0, 0)),
                   pl.BlockSpec((1, 1, C), lambda b: (b, 0, 0))),
        compiler_params=_cparams(("parallel",), blk_bytes),
    )(x_flat, wh, ww, (bh + bw).reshape(C, 1), scale.reshape(C, 1),
      shift.reshape(C, 1), wpos)
    return skip, cnt.reshape(B, C)


# -----------------------------------------------------------------------------
# Kernel 2: (channel select + 1x1 conv + concat) as one per-batch matmul,
# fused with bias + BN1 affine + PReLU and the FGlo spatial-sum accumulator.
# grid = (batch [parallel], HW-tiles [arbitrary: pooled sum revisited]).
# -----------------------------------------------------------------------------
def _select_pw_bn_prelu_kernel(skip_ref, m_ref, b_ref, s_ref, t_ref, a_ref,
                               y_ref, sum_ref, *, use_bf16):
    @pl.when(pl.program_id(1) == 0)
    def _init():
        sum_ref[...] = jnp.zeros_like(sum_ref)

    lhs = m_ref[0]                       # (C_out, C_in) per-batch mixing matrix
    rhs = skip_ref[0]                    # (C_in, tHW)
    if use_bf16:                         # review: 2x MXU throughput (v6e/v7x)
        lhs = lhs.astype(jnp.bfloat16)
        rhs = rhs.astype(jnp.bfloat16)
    y = jnp.dot(lhs, rhs, preferred_element_type=jnp.float32)   # (C_out, tHW)
    y = (y + b_ref[...]) * s_ref[...] + t_ref[...]              # bias + BN1
    y = jnp.where(y >= 0.0, y, a_ref[...] * y)                  # PReLU
    y_ref[0] = y
    sum_ref[0] += jnp.sum(y, axis=1, keepdims=True)             # FGlo pooling


def select_pw_bn_prelu(skip, M, bias, s1, t1, alpha):
    B, C_in, HW = skip.shape
    C_out = M.shape[1]
    t_hw = _hw_tile(HW)
    n_t = HW // t_hw
    blk_bytes = 4 * ((C_in + C_out) * t_hw + C_out * C_in + 5 * C_out)
    kernel = functools.partial(_select_pw_bn_prelu_kernel,
                               use_bf16=USE_BF16_MATMUL)
    return pl.pallas_call(
        kernel,
        out_shape=(jax.ShapeDtypeStruct((B, C_out, HW), jnp.float32),
                   jax.ShapeDtypeStruct((B, C_out, 1), jnp.float32)),
        grid=(B, n_t),
        in_specs=[
            pl.BlockSpec((1, C_in, t_hw), lambda b, t: (b, 0, t)),
            pl.BlockSpec((1, C_out, C_in), lambda b, t: (b, 0, 0)),
            pl.BlockSpec((C_out, 1), lambda b, t: (0, 0)),
            pl.BlockSpec((C_out, 1), lambda b, t: (0, 0)),
            pl.BlockSpec((C_out, 1), lambda b, t: (0, 0)),
            pl.BlockSpec((C_out, 1), lambda b, t: (0, 0)),
        ],
        out_specs=(pl.BlockSpec((1, C_out, t_hw), lambda b, t: (b, 0, t)),
                   pl.BlockSpec((1, C_out, 1), lambda b, t: (b, 0, 0))),
        compiler_params=_cparams(("parallel", "arbitrary"), blk_bytes),
    )(skip, M, bias.reshape(C_out, 1), s1.reshape(C_out, 1),
      t1.reshape(C_out, 1), alpha.reshape(C_out, 1))


# -----------------------------------------------------------------------------
# Kernel 3: FGlo gating multiply + final PReLU (lane-dense elementwise).
# -----------------------------------------------------------------------------
def _gate_prelu_kernel(y_ref, g_ref, a_ref, o_ref):
    z = y_ref[0] * g_ref[0]                      # (C, tHW) * (C, 1)
    o_ref[0] = jnp.where(z >= 0.0, z, a_ref[...] * z)


def gate_prelu(y, gate, alpha):
    B, C, HW = y.shape
    t_hw = _hw_tile(HW)
    n_t = HW // t_hw
    blk_bytes = 4 * (2 * C * t_hw + 2 * C)
    return pl.pallas_call(
        _gate_prelu_kernel,
        out_shape=jax.ShapeDtypeStruct((B, C, HW), jnp.float32),
        grid=(B, n_t),
        in_specs=[
            pl.BlockSpec((1, C, t_hw), lambda b, t: (b, 0, t)),
            pl.BlockSpec((1, C, 1), lambda b, t: (b, 0, 0)),
            pl.BlockSpec((C, 1), lambda b, t: (0, 0)),
        ],
        out_specs=pl.BlockSpec((1, C, t_hw), lambda b, t: (b, 0, t)),
        compiler_params=_cparams(("parallel", "parallel"), blk_bytes),
    )(y, gate.reshape(B, C, 1), alpha.reshape(C, 1))


# -----------------------------------------------------------------------------
# EncoderBlock2 forward
# -----------------------------------------------------------------------------
def encoder_block2(x_nchw, p, threshold=0.5, frac=0.75):
    B, C_in, H, W = x_nchw.shape
    HW = H * W
    # Free reshape: NCHW -> (B, C, H*W); H*W stays the lane-dense minor dim for
    # every kernel, so no NCHW<->NHWC transposes are needed anywhere.
    x_flat = x_nchw.reshape(B, C_in, HW)

    s, t = _bn_affine(p["bn"])
    skip, cnt = axial_bn_cosine(x_flat, p["dwh_w"], p["dwh_b"],
                                p["dww_w"], p["dww_b"], s, t,
                                W=W, threshold=threshold)

    ns = int(frac * C_in)
    nu = C_in - ns
    w_pw = p["pw_w"].reshape(-1, ns)           # (c_pw, ns)
    c_pw = w_pw.shape[0]
    C_out = c_pw + nu

    _, top_idx = jax.lax.top_k(cnt, ns)
    mask = jnp.zeros((B, C_in), dtype=bool).at[
        jnp.arange(B)[:, None], top_idx].set(True)
    # Selected channels in ascending index order, then unselected ascending --
    # matches torch boolean-mask indexing + view().
    order = jnp.argsort(jnp.where(mask, 0, 1).astype(jnp.int32),
                        axis=1, stable=True)
    sel_idx, unsel_idx = order[:, :ns], order[:, ns:]

    # Fold (channel select -> 1x1 conv -> concat pass-through) into one
    # per-batch (C_out, C_in) mixing matrix so Kernel 2 is a single matmul.
    M = jnp.zeros((B, C_out, C_in), jnp.float32)
    bI = jnp.arange(B)[:, None, None]
    jI = jnp.arange(c_pw)[None, :, None]
    M = M.at[bI, jI, sel_idx[:, None, :]].set(
        jnp.broadcast_to(w_pw[None], (B, c_pw, ns)))
    if nu > 0:
        M = M.at[jnp.arange(B)[:, None], (c_pw + jnp.arange(nu))[None, :],
                 unsel_idx].set(1.0)
    bias = jnp.concatenate([p["pw_b"], jnp.zeros((nu,), jnp.float32)])

    s1, t1 = _bn_affine(p["bn1"])
    alpha = p["prelu"]
    y, col_sums = select_pw_bn_prelu(skip, M, bias, s1, t1, alpha)

    # FGlo: tiny FC chain on the pooled (B, C_out) vector stays in XLA.
    mean = col_sums.reshape(B, C_out) * (1.0 / float(HW))
    h = jnp.maximum(mean @ p["fglo_w1"].T + p["fglo_b1"], 0.0)
    gate = jax.nn.sigmoid(h @ p["fglo_w2"].T + p["fglo_b2"])

    out_flat = gate_prelu(y, gate, alpha)
    return out_flat.reshape(B, C_out, H, W)    # already NCHW; no transpose


# -----------------------------------------------------------------------------
# Pure-JAX (XLA) reference of the torch module, for in-script verification.
# -----------------------------------------------------------------------------
def _reference_forward(x, p, threshold, frac):
    B, C, H, W = x.shape
    hp = jnp.pad(x, ((0, 0), (0, 0), (3, 3), (0, 0)))
    dwh = p["dwh_b"][None, :, None, None]
    for k in range(7):
        dwh = dwh + p["dwh_w"][None, :, k, None, None] * hp[:, :, k:k + H, :]
    wp = jnp.pad(x, ((0, 0), (0, 0), (0, 0), (3, 3)))
    dww = p["dww_b"][None, :, None, None]
    for k in range(7):
        dww = dww + p["dww_w"][None, :, k, None, None] * wp[:, :, :, k:k + W]
    ax = x + dwh + dww
    s, t = _bn_affine(p["bn"])
    skip = ax * s[None, :, None, None] + t[None, :, None, None]

    flat = skip.reshape(B, C, H * W)
    nrm = jnp.sqrt(jnp.sum(flat * flat, axis=-1, keepdims=True))
    fn = flat / jnp.maximum(nrm, 1e-12)
    cos = jnp.einsum("bcp,bdp->bcd", fn, fn,
                     precision=jax.lax.Precision.HIGHEST)
    upper = jnp.triu(cos, k=1)
    cnt = jnp.sum((upper < threshold).astype(jnp.float32), axis=1)

    ns = int(frac * C)
    _, top_idx = jax.lax.top_k(cnt, ns)
    mask = jnp.zeros((B, C), bool).at[jnp.arange(B)[:, None], top_idx].set(True)
    order = jnp.argsort(jnp.where(mask, 0, 1).astype(jnp.int32), axis=1,
                        stable=True)
    sel, unsel = order[:, :ns], order[:, ns:]
    selected = jnp.take_along_axis(flat, sel[:, :, None], axis=1)
    unselected = jnp.take_along_axis(flat, unsel[:, :, None], axis=1)

    w_pw = p["pw_w"].reshape(-1, ns)
    xpw = jnp.einsum("om,bmp->bop", w_pw, selected,
                     precision=jax.lax.Precision.HIGHEST)
    xpw = xpw + p["pw_b"][None, :, None]
    xcat = jnp.concatenate([xpw, unselected], axis=1)

    s1, t1 = _bn_affine(p["bn1"])
    a = p["prelu"][None, :, None]
    y = xcat * s1[None, :, None] + t1[None, :, None]
    y = jnp.where(y >= 0.0, y, a * y)

    mean = jnp.mean(y, axis=-1)
    h = jnp.maximum(mean @ p["fglo_w1"].T + p["fglo_b1"], 0.0)
    gate = jax.nn.sigmoid(h @ p["fglo_w2"].T + p["fglo_b2"])
    z = y * gate[:, :, None]
    z = jnp.where(z >= 0.0, z, a * z)
    return z.reshape(B, z.shape[1], H, W)


# -----------------------------------------------------------------------------
# Deterministic synthetic parameters (shapes follow the nn.Module)
# -----------------------------------------------------------------------------
def init_encoder_block2_params(in_c, out_c, frac, seed=0):
    keys = jax.random.split(jax.random.PRNGKey(seed), 12)

    def nrm(k, shape, scale=0.1):
        return (scale * jax.random.normal(k, shape)).astype(jnp.float32)

    def bn(c, k):
        k1, k2, k3, k4 = jax.random.split(k, 4)
        return dict(
            gamma=(1.0 + 0.1 * jax.random.normal(k1, (c,))).astype(jnp.float32),
            beta=(0.1 * jax.random.normal(k2, (c,))).astype(jnp.float32),
            mean=(0.1 * jax.random.normal(k3, (c,))).astype(jnp.float32),
            var=(1.0 + 0.5 * jax.random.uniform(k4, (c,))).astype(jnp.float32))

    ns = int(frac * in_c)
    c_pw = int(out_c - in_c * (1 - frac))
    red = out_c // 16
    return dict(
        dwh_w=nrm(keys[0], (in_c, 7)), dwh_b=nrm(keys[1], (in_c,)),
        dww_w=nrm(keys[2], (in_c, 7)), dww_b=nrm(keys[3], (in_c,)),
        bn=bn(in_c, keys[10]),
        pw_w=nrm(keys[4], (c_pw, ns, 1, 1)), pw_b=nrm(keys[5], (c_pw,)),
        bn1=bn(out_c, keys[11]),
        prelu=jnp.full((out_c,), 0.25, jnp.float32),
        fglo_w1=nrm(keys[6], (red, out_c)), fglo_b1=nrm(keys[7], (red,)),
        fglo_w2=nrm(keys[8], (out_c, red)), fglo_b2=nrm(keys[9], (out_c,)),
    )


if __name__ == "__main__":
    B, IN_C, OUT_C, H, W = 2, 16, 32, 16, 16
    THRESHOLD, FRAC = 0.5, 0.75

    params = init_encoder_block2_params(IN_C, OUT_C, FRAC, seed=0)

    # Deterministic input with a correlated channel group so the cosine-count
    # channel selection is non-degenerate (and stays far from the threshold).
    k_shared, k_noise = jax.random.split(jax.random.PRNGKey(0))
    shared = jax.random.normal(k_shared, (B, 1, H, W), jnp.float32)
    noise = jax.random.normal(k_noise, (B, IN_C, H, W), jnp.float32)
    mix = jnp.where(jnp.arange(IN_C)[None, :, None, None] < 6, 0.8, 0.0)
    x = (mix * shared + jnp.sqrt(1.0 - mix * mix) * noise).astype(jnp.float32)

    fwd = jax.jit(functools.partial(encoder_block2,
                                    threshold=THRESHOLD, frac=FRAC))
    y = fwd(x, params)
    jax.block_until_ready(y)
    assert y.shape == (B, OUT_C, H, W) and y.dtype == jnp.float32
    assert bool(jnp.all(jnp.isfinite(y)))

    # Cross-check against a pure-JAX re-implementation of the torch module.
    y_ref = jax.jit(functools.partial(_reference_forward,
                                      threshold=THRESHOLD, frac=FRAC))(x, params)
    err = float(jnp.max(jnp.abs(y - y_ref)))
    assert err < 2e-2, f"kernel/reference mismatch: max abs err = {err}"
    print("KERNEL_OK")
</pallas_src>

<mosaic_0001>
module attributes {stable_mosaic.version = 11 : i64} {
  func.func @_axial_bn_cosine_kernel(%arg0: i32, %arg1: memref<1x16x256xf32, #tpu.memory_space<vmem>>, %arg2: memref<16x7xf32, #tpu.memory_space<vmem>>, %arg3: memref<16x7xf32, #tpu.memory_space<vmem>>, %arg4: memref<16x1xf32, #tpu.memory_space<vmem>>, %arg5: memref<16x1xf32, #tpu.memory_space<vmem>>, %arg6: memref<16x1xf32, #tpu.memory_space<vmem>>, %arg7: memref<1x256xi32, #tpu.memory_space<vmem>>, %arg8: memref<1x16x256xf32, #tpu.memory_space<vmem>>, %arg9: memref<1x1x16xf32, #tpu.memory_space<vmem>>) attributes {dimension_semantics = [#tpu.dimension_semantics<parallel>], iteration_bounds = array<i64: 2>, scalar_prefetch = 0 : i64, scratch_operands = 0 : i64, tpu.core_type = #tpu.core_type<tc>, window_params = [{transform_indices = @transform_0, window_bounds = array<i64: 1, 16, 256>}, {pipeline_mode = #tpu.pipeline_mode<synchronous>, transform_indices = @transform_1, window_bounds = array<i64: 16, 7>}, {pipeline_mode = #tpu.pipeline_mode<synchronous>, transform_indices = @transform_2, window_bounds = array<i64: 16, 7>}, {pipeline_mode = #tpu.pipeline_mode<synchronous>, transform_indices = @transform_3, window_bounds = array<i64: 16, 1>}, {pipeline_mode = #tpu.pipeline_mode<synchronous>, transform_indices = @transform_4, window_bounds = array<i64: 16, 1>}, {pipeline_mode = #tpu.pipeline_mode<synchronous>, transform_indices = @transform_5, window_bounds = array<i64: 16, 1>}, {pipeline_mode = #tpu.pipeline_mode<synchronous>, transform_indices = @transform_6, window_bounds = array<i64: 1, 256>}, {transform_indices = @transform_7, window_bounds = array<i64: 1, 16, 256>}, {transform_indices = @transform_8, window_bounds = array<i64: 1, 1, 16>}]} {
    %c0 = arith.constant 0 : index
    %c0_0 = arith.constant 0 : index
    %c0_1 = arith.constant 0 : index
    %0 = vector.load %arg1[%c0, %c0_0, %c0_1] : memref<1x16x256xf32, #tpu.memory_space<vmem>>, vector<1x16x256xf32>
    %1 = vector.shape_cast %0 : vector<1x16x256xf32> to vector<16x256xf32>
    %c0_2 = arith.constant 0 : index
    %c0_3 = arith.constant 0 : index
    %2 = vector.load %arg2[%c0_2, %c0_3] : memref<16x7xf32, #tpu.memory_space<vmem>>, vector<16x7xf32>
    %c0_4 = arith.constant 0 : index
    %c0_5 = arith.constant 0 : index
    %3 = vector.load %arg3[%c0_4, %c0_5] : memref<16x7xf32, #tpu.memory_space<vmem>>, vector<16x7xf32>
    %c0_6 = arith.constant 0 : index
    %c0_7 = arith.constant 0 : index
    %4 = vector.load %arg7[%c0_6, %c0_7] : memref<1x256xi32, #tpu.memory_space<vmem>>, vector<1x256xi32>
    %cst = arith.constant 0.000000e+00 : f32
    %5 = vector.broadcast %cst : f32 to vector<16x128xf32>
    %6 = tpu.concatenate %5, %1, %5 in 1 : vector<16x128xf32>, vector<16x256xf32>, vector<16x128xf32> -> vector<16x512xf32>
    %c0_8 = arith.constant 0 : index
    %c0_9 = arith.constant 0 : index
    %7 = vector.load %arg4[%c0_8, %c0_9] : memref<16x1xf32, #tpu.memory_space<vmem>>, vector<16x1xf32>
    %8 = vector.broadcast %7 : vector<16x1xf32> to vector<16x256xf32>
    %9 = arith.addf %1, %8 : vector<16x256xf32>
    %10 = vector.extract_strided_slice %2 {offsets = [0, 0], sizes = [16, 1], strides = [1, 1]} : vector<16x7xf32> to vector<16x1xf32>
    %11 = vector.extract_strided_slice %6 {offsets = [0, 80], sizes = [16, 256], strides = [1, 1]} : vector<16x512xf32> to vector<16x256xf32>
    %12 = vector.broadcast %10 : vector<16x1xf32> to vector<16x256xf32>
    %13 = arith.mulf %12, %11 : vector<16x256xf32>
    %14 = arith.addf %9, %13 : vector<16x256xf32>
    %15 = vector.extract_strided_slice %2 {offsets = [0, 1], sizes = [16, 1], strides = [1, 1]} : vector<16x7xf32> to vector<16x1xf32>
    %16 = vector.extract_strided_slice %6 {offsets = [0, 96], sizes = [16, 256], strides = [1, 1]} : vector<16x512xf32> to vector<16x256xf32>
    %17 = vector.broadcast %15 : vector<16x1xf32> to vector<16x256xf32>
    %18 = arith.mulf %17, %16 : vector<16x256xf32>
    %19 = arith.addf %14, %18 : vector<16x256xf32>
    %20 = vector.extract_strided_slice %2 {offsets = [0, 2], sizes = [16, 1], strides = [1, 1]} : vector<16x7xf32> to vector<16x1xf32>
    %21 = vector.extract_strided_slice %6 {offsets = [0, 112], sizes = [16, 256], strides = [1, 1]} : vector<16x512xf32> to vector<16x256xf32>
    %22 = vector.broadcast %20 : vector<16x1xf32> to vector<16x256xf32>
    %23 = arith.mulf %22, %21 : vector<16x256xf32>
    %24 = arith.addf %19, %23 : vector<16x256xf32>
    %25 = vector.extract_strided_slice %2 {offsets = [0, 3], sizes = [16, 1], strides = [1, 1]} : vector<16x7xf32> to vector<16x1xf32>
    %26 = vector.extract_strided_slice %6 {offsets = [0, 128], sizes = [16, 256], strides = [1, 1]} : vector<16x512xf32> to vector<16x256xf32>
    %27 = vector.broadcast %25 : vector<16x1xf32> to vector<16x256xf32>
    %28 = arith.mulf %27, %26 : vector<16x256xf32>
    %29 = arith.addf %24, %28 : vector<16x256xf32>
    %30 = vector.extract_strided_slice %2 {offsets = [0, 4], sizes = [16, 1], strides = [1, 1]} : vector<16x7xf32> to vector<16x1xf32>
    %31 = vector.extract_strided_slice %6 {offsets = [0, 144], sizes = [16, 256], strides = [1, 1]} : vector<16x512xf32> to vector<16x256xf32>
    %32 = vector.broadcast %30 : vector<16x1xf32> to vector<16x256xf32>
    %33 = arith.mulf %32, %31 : vector<16x256xf32>
    %34 = arith.addf %29, %33 : vector<16x256xf32>
    %35 = vector.extract_strided_slice %2 {offsets = [0, 5], sizes = [16, 1], strides = [1, 1]} : vector<16x7xf32> to vector<16x1xf32>
    %36 = vector.extract_strided_slice %6 {offsets = [0, 160], sizes = [16, 256], strides = [1, 1]} : vector<16x512xf32> to vector<16x256xf32>
    %37 = vector.broadcast %35 : vector<16x1xf32> to vector<16x256xf32>
    %38 = arith.mulf %37, %36 : vector<16x256xf32>
    %39 = arith.addf %34, %38 : vector<16x256xf32>
    %40 = vector.extract_strided_slice %2 {offsets = [0, 6], sizes = [16, 1], strides = [1, 1]} : vector<16x7xf32> to vector<16x1xf32>
    %41 = vector.extract_strided_slice %6 {offsets = [0, 176], sizes = [16, 256], strides = [1, 1]} : vector<16x512xf32> to vector<16x256xf32>
    %42 = vector.broadcast %40 : vector<16x1xf32> to vector<16x256xf32>
    %43 = arith.mulf %42, %41 : vector<16x256xf32>
    %44 = arith.addf %39, %43 : vector<16x256xf32>
    %45 = vector.extract_strided_slice %6 {offsets = [0, 125], sizes = [16, 256], strides = [1, 1]} : vector<16x512xf32> to vector<16x256xf32>
    %c3_i32 = arith.constant 3 : i32
    %46 = vector.broadcast %c3_i32 : i32 to vector<1x256xi32>
    %47 = arith.cmpi sge, %4, %46 : vector<1x256xi32>
    %cst_10 = arith.constant 0.000000e+00 : f32
    %48 = vector.shape_cast %47 : vector<1x256xi1> to vector<1x256xi1>
    %49 = vector.broadcast %48 : vector<1x256xi1> to vector<16x256xi1>
    %50 = vector.broadcast %cst_10 : f32 to vector<16x256xf32>
    %51 = arith.select %49, %45, %50 : vector<16x256xi1>, vector<16x256xf32>
    %52 = vector.extract_strided_slice %3 {offsets = [0, 0], sizes = [16, 1], strides = [1, 1]} : vector<16x7xf32> to vector<16x1xf32>
    %53 = vector.broadcast %52 : vector<16x1xf32> to vector<16x256xf32>
    %54 = arith.mulf %53, %51 : vector<16x256xf32>
    %55 = arith.addf %44, %54 : vector<16x256xf32>
    %56 = vector.extract_strided_slice %6 {offsets = [0, 126], sizes = [16, 256], strides = [1, 1]} : vector<16x512xf32> to vector<16x256xf32>
    %c2_i32 = arith.constant 2 : i32
    %57 = vector.broadcast %c2_i32 : i32 to vector<1x256xi32>
    %58 = arith.cmpi sge, %4, %57 : vector<1x256xi32>
    %cst_11 = arith.constant 0.000000e+00 : f32
    %59 = vector.shape_cast %58 : vector<1x256xi1> to vector<1x256xi1>
    %60 = vector.broadcast %59 : vector<1x256xi1> to vector<16x256xi1>
    %61 = vector.broadcast %cst_11 : f32 to vector<16x256xf32>
    %62 = arith.select %60, %56, %61 : vector<16x256xi1>, vector<16x256xf32>
    %63 = vector.extract_strided_slice %3 {offsets = [0, 1], sizes = [16, 1], strides = [1, 1]} : vector<16x7xf32> to vector<16x1xf32>
    %64 = vector.broadcast %63 : vector<16x1xf32> to vector<16x256xf32>
    %65 = arith.mulf %64, %62 : vector<16x256xf32>
    %66 = arith.addf %55, %65 : vector<16x256xf32>
    %67 = vector.extract_strided_slice %6 {offsets = [0, 127], sizes = [16, 256], strides = [1, 1]} : vector<16x512xf32> to vector<16x256xf32>
    %c1_i32 = arith.constant 1 : i32
    %68 = vector.broadcast %c1_i32 : i32 to vector<1x256xi32>
    %69 = arith.cmpi sge, %4, %68 : vector<1x256xi32>
    %cst_12 = arith.constant 0.000000e+00 : f32
    %70 = vector.shape_cast %69 : vector<1x256xi1> to vector<1x256xi1>
    %71 = vector.broadcast %70 : vector<1x256xi1> to vector<16x256xi1>
    %72 = vector.broadcast %cst_12 : f32 to vector<16x256xf32>
    %73 = arith.select %71, %67, %72 : vector<16x256xi1>, vector<16x256xf32>
    %74 = vector.extract_strided_slice %3 {offsets = [0, 2], sizes = [16, 1], strides = [1, 1]} : vector<16x7xf32> to vector<16x1xf32>
    %75 = vector.broadcast %74 : vector<16x1xf32> to vector<16x256xf32>
    %76 = arith.mulf %75, %73 : vector<16x256xf32>
    %77 = arith.addf %66, %76 : vector<16x256xf32>
    %78 = vector.extract_strided_slice %6 {offsets = [0, 128], sizes = [16, 256], strides = [1, 1]} : vector<16x512xf32> to vector<16x256xf32>
    %79 = vector.extract_strided_slice %3 {offsets = [0, 3], sizes = [16, 1], strides = [1, 1]} : vector<16x7xf32> to vector<16x1xf32>
    %80 = vector.broadcast %79 : vector<16x1xf32> to vector<16x256xf32>
    %81 = arith.mulf %80, %78 : vector<16x256xf32>
    %82 = arith.addf %77, %81 : vector<16x256xf32>
    %83 = vector.extract_strided_slice %6 {offsets = [0, 129], sizes = [16, 256], strides = [1, 1]} : vector<16x512xf32> to vector<16x256xf32>
    %c15_i32 = arith.constant 15 : i32
    %84 = vector.broadcast %c15_i32 : i32 to vector<1x256xi32>
    %85 = arith.cmpi slt, %4, %84 : vector<1x256xi32>
    %cst_13 = arith.constant 0.000000e+00 : f32
    %86 = vector.shape_cast %85 : vector<1x256xi1> to vector<1x256xi1>
    %87 = vector.broadcast %86 : vector<1x256xi1> to vector<16x256xi1>
    %88 = vector.broadcast %cst_13 : f32 to vector<16x256xf32>
    %89 = arith.select %87, %83, %88 : vector<16x256xi1>, vector<16x256xf32>
    %90 = vector.extract_strided_slice %3 {offsets = [0, 4], sizes = [16, 1], strides = [1, 1]} : vector<16x7xf32> to vector<16x1xf32>
    %91 = vector.broadcast %90 : vector<16x1xf32> to vector<16x256xf32>
    %92 = arith.mulf %91, %89 : vector<16x256xf32>
    %93 = arith.addf %82, %92 : vector<16x256xf32>
    %94 = vector.extract_strided_slice %6 {offsets = [0, 130], sizes = [16, 256], strides = [1, 1]} : vector<16x512xf32> to vector<16x256xf32>
    %c14_i32 = arith.constant 14 : i32
    %95 = vector.broadcast %c14_i32 : i32 to vector<1x256xi32>
    %96 = arith.cmpi slt, %4, %95 : vector<1x256xi32>
    %cst_14 = arith.constant 0.000000e+00 : f32
    %97 = vector.shape_cast %96 : vector<1x256xi1> to vector<1x256xi1>
    %98 = vector.broadcast %97 : vector<1x256xi1> to vector<16x256xi1>
    %99 = vector.broadcast %cst_14 : f32 to vector<16x256xf32>
    %100 = arith.select %98, %94, %99 : vector<16x256xi1>, vector<16x256xf32>
    %101 = vector.extract_strided_slice %3 {offsets = [0, 5], sizes = [16, 1], strides = [1, 1]} : vector<16x7xf32> to vector<16x1xf32>
    %102 = vector.broadcast %101 : vector<16x1xf32> to vector<16x256xf32>
    %103 = arith.mulf %102, %100 : vector<16x256xf32>
    %104 = arith.addf %93, %103 : vector<16x256xf32>
    %105 = vector.extract_strided_slice %6 {offsets = [0, 131], sizes = [16, 256], strides = [1, 1]} : vector<16x512xf32> to vector<16x256xf32>
    %c13_i32 = arith.constant 13 : i32
    %106 = vector.broadcast %c13_i32 : i32 to vector<1x256xi32>
    %107 = arith.cmpi slt, %4, %106 : vector<1x256xi32>
    %cst_15 = arith.constant 0.000000e+00 : f32
    %108 = vector.shape_cast %107 : vector<1x256xi1> to vector<1x256xi1>
    %109 = vector.broadcast %108 : vector<1x256xi1> to vector<16x256xi1>
    %110 = vector.broadcast %cst_15 : f32 to vector<16x256xf32>
    %111 = arith.select %109, %105, %110 : vector<16x256xi1>, vector<16x256xf32>
    %112 = vector.extract_strided_slice %3 {offsets = [0, 6], sizes = [16, 1], strides = [1, 1]} : vector<16x7xf32> to vector<16x1xf32>
    %113 = vector.broadcast %112 : vector<16x1xf32> to vector<16x256xf32>
    %114 = arith.mulf %113, %111 : vector<16x256xf32>
    %115 = arith.addf %104, %114 : vector<16x256xf32>
    %c0_16 = arith.constant 0 : index
    %c0_17 = arith.constant 0 : index
    %116 = vector.load %arg5[%c0_16, %c0_17] : memref<16x1xf32, #tpu.memory_space<vmem>>, vector<16x1xf32>
    %117 = vector.broadcast %116 : vector<16x1xf32> to vector<16x256xf32>
    %118 = arith.mulf %115, %117 : vector<16x256xf32>
    %c0_18 = arith.constant 0 : index
    %c0_19 = arith.constant 0 : index
    %119 = vector.load %arg6[%c0_18, %c0_19] : memref<16x1xf32, #tpu.memory_space<vmem>>, vector<16x1xf32>
    %120 = vector.broadcast %119 : vector<16x1xf32> to vector<16x256xf32>
    %121 = arith.addf %118, %120 : vector<16x256xf32>
    %c0_20 = arith.constant 0 : index
    %c0_21 = arith.constant 0 : index
    %c0_22 = arith.constant 0 : index
    %122 = vector.load %arg8[%c0_20, %c0_21, %c0_22] : memref<1x16x256xf32, #tpu.memory_space<vmem>>, vector<1x16x256xf32>
    %123 = vector.shape_cast %122 : vector<1x16x256xf32> to vector<16x256xf32>
    %124 = vector.shape_cast %121 : vector<16x256xf32> to vector<1x16x256xf32>
    tpu.vector_store %arg8[%c0_20, %c0_21, %c0_22], %124 {strides = array<i32>} : memref<1x16x256xf32, #tpu.memory_space<vmem>>, vector<1x16x256xf32>,
    %cst_23 = arith.constant dense<0.000000e+00> : vector<16x16xf32>
    %125 = tpu.matmul %121, %121, %cst_23 {dimension_numbers = #tpu.dot_dimension_numbers<[1], [1], [0], [0], [0, 0, 1, 0], [], []>} : vector<16x256xf32>, vector<16x256xf32>, vector<16x16xf32> -> vector<16x16xf32>
    %126 = tpu.iota {dimensions = array<i32: 0>} : vector<16x16xi32>
    %127 = tpu.iota {dimensions = array<i32: 1>} : vector<16x16xi32>
    %128 = arith.cmpi eq, %126, %127 : vector<16x16xi32>
    %cst_24 = arith.constant 0.000000e+00 : f32
    %129 = vector.broadcast %cst_24 : f32 to vector<16x16xf32>
    %130 = arith.select %128, %125, %129 : vector<16x16xi1>, vector<16x16xf32>
    %cst_25 = arith.constant dense<0.000000e+00> : vector<16xf32>
    %131 = vector.multi_reduction <add>, %130, %cst_25 [1] : vector<16x16xf32> to vector<16xf32>
    %132 = vector.shape_cast %131 : vector<16xf32> to vector<16x1xf32>
    %cst_26 = arith.constant dense<0.000000e+00> : vector<16xf32>
    %133 = vector.multi_reduction <add>, %130, %cst_26 [0] : vector<16x16xf32> to vector<16xf32>
    %134 = vector.shape_cast %133 : vector<16xf32> to vector<1x16xf32>
    %cst_27 = arith.constant 1.000000e-24 : f32
    %135 = vector.broadcast %cst_27 : f32 to vector<16x1xf32>
    %136 = arith.maximumf %132, %135 : vector<16x1xf32>
    %137 = math.rsqrt %136 : vector<16x1xf32>
    %cst_28 = arith.constant 1.000000e-24 : f32
    %138 = vector.broadcast %cst_28 : f32 to vector<1x16xf32>
    %139 = arith.maximumf %134, %138 : vector<1x16xf32>
    %140 = math.rsqrt %139 : vector<1x16xf32>
    %141 = vector.broadcast %137 : vector<16x1xf32> to vector<16x16xf32>
    %142 = arith.mulf %125, %141 : vector<16x16xf32>
    %143 = vector.broadcast %140 : vector<1x16xf32> to vector<16x16xf32>
    %144 = arith.mulf %142, %143 : vector<16x16xf32>
    %145 = arith.cmpi sgt, %127, %126 : vector<16x16xi32>
    %cst_29 = arith.constant 0.000000e+00 : f32
    %146 = vector.broadcast %cst_29 : f32 to vector<16x16xf32>
    %147 = arith.select %145, %144, %146 : vector<16x16xi1>, vector<16x16xf32>
    %cst_30 = arith.constant 5.000000e-01 : f32
    %148 = vector.broadcast %cst_30 : f32 to vector<16x16xf32>
    %149 = arith.cmpf olt, %147, %148 : vector<16x16xf32>
    %150 = arith.extui %149 : vector<16x16xi1> to vector<16x16xi32>
    %151 = arith.sitofp %150 : vector<16x16xi32> to vector<16x16xf32>
    %cst_31 = arith.constant dense<0.000000e+00> : vector<16xf32>
    %152 = vector.multi_reduction <add>, %151, %cst_31 [0] : vector<16x16xf32> to vector<16xf32>
    %153 = vector.shape_cast %152 : vector<16xf32> to vector<1x16xf32>
    %c0_32 = arith.constant 0 : index
    %c0_33 = arith.constant 0 : index
    %c0_34 = arith.constant 0 : index
    %154 = vector.load %arg9[%c0_32, %c0_33, %c0_34] : memref<1x1x16xf32, #tpu.memory_space<vmem>>, vector<1x1x16xf32>
    %155 = vector.shape_cast %154 : vector<1x1x16xf32> to vector<1x16xf32>
    %156 = vector.shape_cast %153 : vector<1x16xf32> to vector<1x1x16xf32>
    tpu.vector_store %arg9[%c0_32, %c0_33, %c0_34], %156 {strides = array<i32>} : memref<1x1x16xf32, #tpu.memory_space<vmem>>, vector<1x1x16xf32>,
    return
  }
  func.func @transform_0(%arg0: i32) -> (i32, i32, i32) {
    %c0_i32 = arith.constant 0 : i32
    %c0_i32_0 = arith.constant 0 : i32
    %c0_i32_1 = arith.constant 0 : i32
    return %arg0, %c0_i32, %c0_i32_0 : i32, i32, i32
  }
  func.func @transform_1(%arg0: i32) -> (i32, i32) {
    %c0_i32 = arith.constant 0 : i32
    %c0_i32_0 = arith.constant 0 : i32
    %c0_i32_1 = arith.constant 0 : i32
    return %c0_i32, %c0_i32_0 : i32, i32
  }
  func.func @transform_2(%arg0: i32) -> (i32, i32) {
    %c0_i32 = arith.constant 0 : i32
    %c0_i32_0 = arith.constant 0 : i32
    %c0_i32_1 = arith.constant 0 : i32
    return %c0_i32, %c0_i32_0 : i32, i32
  }
  func.func @transform_3(%arg0: i32) -> (i32, i32) {
    %c0_i32 = arith.constant 0 : i32
    %c0_i32_0 = arith.constant 0 : i32
    %c0_i32_1 = arith.constant 0 : i32
    return %c0_i32, %c0_i32_0 : i32, i32
  }
  func.func @transform_4(%arg0: i32) -> (i32, i32) {
    %c0_i32 = arith.constant 0 : i32
    %c0_i32_0 = arith.constant 0 : i32
    %c0_i32_1 = arith.constant 0 : i32
    return %c0_i32, %c0_i32_0 : i32, i32
  }
  func.func @transform_5(%arg0: i32) -> (i32, i32) {
    %c0_i32 = arith.constant 0 : i32
    %c0_i32_0 = arith.constant 0 : i32
    %c0_i32_1 = arith.constant 0 : i32
    return %c0_i32, %c0_i32_0 : i32, i32
  }
  func.func @transform_6(%arg0: i32) -> (i32, i32) {
    %c0_i32 = arith.constant 0 : i32
    %c0_i32_0 = arith.constant 0 : i32
    %c0_i32_1 = arith.constant 0 : i32
    return %c0_i32, %c0_i32_0 : i32, i32
  }
  func.func @transform_7(%arg0: i32) -> (i32, i32, i32) {
    %c0_i32 = arith.constant 0 : i32
    %c0_i32_0 = arith.constant 0 : i32
    %c0_i32_1 = arith.constant 0 : i32
    return %arg0, %c0_i32, %c0_i32_0 : i32, i32, i32
  }
  func.func @transform_8(%arg0: i32) -> (i32, i32, i32) {
    %c0_i32 = arith.constant 0 : i32
    %c0_i32_0 = arith.constant 0 : i32
    %c0_i32_1 = arith.constant 0 : i32
    return %arg0, %c0_i32, %c0_i32_0 : i32, i32, i32
  }
}

module attributes {stable_mosaic.version = 11 : i64} {
  func.func @_select_pw_bn_prelu_kernel(%arg0: i32, %arg1: i32, %arg2: memref<1x16x256xf32, #tpu.memory_space<vmem>>, %arg3: memref<1x32x16xf32, #tpu.memory_space<vmem>>, %arg4: memref<32x1xf32, #tpu.memory_space<vmem>>, %arg5: memref<32x1xf32, #tpu.memory_space<vmem>>, %arg6: memref<32x1xf32, #tpu.memory_space<vmem>>, %arg7: memref<32x1xf32, #tpu.memory_space<vmem>>, %arg8: memref<1x32x256xf32, #tpu.memory_space<vmem>>, %arg9: memref<1x32x1xf32, #tpu.memory_space<vmem>>) attributes {dimension_semantics = [#tpu.dimension_semantics<parallel>, #tpu.dimension_semantics<arbitrary>], iteration_bounds = array<i64: 2, 1>, scalar_prefetch = 0 : i64, scratch_operands = 0 : i64, tpu.core_type = #tpu.core_type<tc>, window_params = [{transform_indices = @transform_0, window_bounds = array<i64: 1, 16, 256>}, {transform_indices = @transform_1, window_bounds = array<i64: 1, 32, 16>}, {pipeline_mode = #tpu.pipeline_mode<synchronous>, transform_indices = @transform_2, window_bounds = array<i64: 32, 1>}, {pipeline_mode = #tpu.pipeline_mode<synchronous>, transform_indices = @transform_3, window_bounds = array<i64: 32, 1>}, {pipeline_mode = #tpu.pipeline_mode<synchronous>, transform_indices = @transform_4, window_bounds = array<i64: 32, 1>}, {pipeline_mode = #tpu.pipeline_mode<synchronous>, transform_indices = @transform_5, window_bounds = array<i64: 32, 1>}, {transform_indices = @transform_6, window_bounds = array<i64: 1, 32, 256>}, {transform_indices = @transform_7, window_bounds = array<i64: 1, 32, 1>}]} {
    %c0_i32 = arith.constant 0 : i32
    %0 = arith.cmpi eq, %arg1, %c0_i32 : i32
    %1 = arith.extui %0 : i1 to i32
    %c0_i32_0 = arith.constant 0 : i32
    %2 = arith.cmpi ne, %1, %c0_i32_0 : i32
    scf.if %2 {
      %cst_25 = arith.constant 0.000000e+00 : f32
      %34 = vector.broadcast %cst_25 : f32 to vector<1x32x1xf32>
      %c0_26 = arith.constant 0 : index
      %c0_27 = arith.constant 0 : index
      %c0_28 = arith.constant 0 : index
      %35 = vector.load %arg9[%c0_26, %c0_27, %c0_28] : memref<1x32x1xf32, #tpu.memory_space<vmem>>, vector<1x32x1xf32>
      tpu.vector_store %arg9[%c0_26, %c0_27, %c0_28], %34 {strides = array<i32>} : memref<1x32x1xf32, #tpu.memory_space<vmem>>, vector<1x32x1xf32>,
    } else {
    }
    %c0 = arith.constant 0 : index
    %c0_1 = arith.constant 0 : index
    %c0_2 = arith.constant 0 : index
    %3 = vector.load %arg3[%c0, %c0_1, %c0_2] : memref<1x32x16xf32, #tpu.memory_space<vmem>>, vector<1x32x16xf32>
    %4 = vector.shape_cast %3 : vector<1x32x16xf32> to vector<32x16xf32>
    %c0_3 = arith.constant 0 : index
    %c0_4 = arith.constant 0 : index
    %c0_5 = arith.constant 0 : index
    %5 = vector.load %arg2[%c0_3, %c0_4, %c0_5] : memref<1x16x256xf32, #tpu.memory_space<vmem>>, vector<1x16x256xf32>
    %6 = vector.shape_cast %5 : vector<1x16x256xf32> to vector<16x256xf32>
    %cst = arith.constant dense<0.000000e+00> : vector<32x256xf32>
    %7 = tpu.matmul %4, %6, %cst {dimension_numbers = #tpu.dot_dimension_numbers<[1], [0], [0], [1], [0, 0, 1, 1], [], []>} : vector<32x16xf32>, vector<16x256xf32>, vector<32x256xf32> -> vector<32x256xf32>
    %c0_6 = arith.constant 0 : index
    %c0_7 = arith.constant 0 : index
    %8 = vector.load %arg4[%c0_6, %c0_7] : memref<32x1xf32, #tpu.memory_space<vmem>>, vector<32x1xf32>
    %9 = vector.broadcast %8 : vector<32x1xf32> to vector<32x256xf32>
    %10 = arith.addf %7, %9 : vector<32x256xf32>
    %c0_8 = arith.constant 0 : index
    %c0_9 = arith.constant 0 : index
    %11 = vector.load %arg5[%c0_8, %c0_9] : memref<32x1xf32, #tpu.memory_space<vmem>>, vector<32x1xf32>
    %12 = vector.broadcast %11 : vector<32x1xf32> to vector<32x256xf32>
    %13 = arith.mulf %10, %12 : vector<32x256xf32>
    %c0_10 = arith.constant 0 : index
    %c0_11 = arith.constant 0 : index
    %14 = vector.load %arg6[%c0_10, %c0_11] : memref<32x1xf32, #tpu.memory_space<vmem>>, vector<32x1xf32>
    %15 = vector.broadcast %14 : vector<32x1xf32> to vector<32x256xf32>
    %16 = arith.addf %13, %15 : vector<32x256xf32>
    %cst_12 = arith.constant 0.000000e+00 : f32
    %17 = vector.broadcast %cst_12 : f32 to vector<32x256xf32>
    %18 = arith.cmpf oge, %16, %17 : vector<32x256xf32>
    %c0_13 = arith.constant 0 : index
    %c0_14 = arith.constant 0 : index
    %19 = vector.load %arg7[%c0_13, %c0_14] : memref<32x1xf32, #tpu.memory_space<vmem>>, vector<32x1xf32>
    %20 = vector.broadcast %19 : vector<32x1xf32> to vector<32x256xf32>
    %21 = arith.mulf %20, %16 : vector<32x256xf32>
    %22 = arith.select %18, %16, %21 : vector<32x256xi1>, vector<32x256xf32>
    %c0_15 = arith.constant 0 : index
    %c0_16 = arith.constant 0 : index
    %c0_17 = arith.constant 0 : index
    %23 = vector.load %arg8[%c0_15, %c0_16, %c0_17] : memref<1x32x256xf32, #tpu.memory_space<vmem>>, vector<1x32x256xf32>
    %24 = vector.shape_cast %23 : vector<1x32x256xf32> to vector<32x256xf32>
    %25 = vector.shape_cast %22 : vector<32x256xf32> to vector<1x32x256xf32>
    tpu.vector_store %arg8[%c0_15, %c0_16, %c0_17], %25 {strides = array<i32>} : memref<1x32x256xf32, #tpu.memory_space<vmem>>, vector<1x32x256xf32>,
    %c0_18 = arith.constant 0 : index
    %c0_19 = arith.constant 0 : index
    %c0_20 = arith.constant 0 : index
    %26 = vector.load %arg9[%c0_18, %c0_19, %c0_20] : memref<1x32x1xf32, #tpu.memory_space<vmem>>, vector<1x32x1xf32>
    %27 = vector.shape_cast %26 : vector<1x32x1xf32> to vector<32x1xf32>
    %cst_21 = arith.constant dense<0.000000e+00> : vector<32xf32>
    %28 = vector.multi_reduction <add>, %22, %cst_21 [1] : vector<32x256xf32> to vector<32xf32>
    %29 = vector.shape_cast %28 : vector<32xf32> to vector<32x1xf32>
    %30 = arith.addf %27, %29 : vector<32x1xf32>
    %c0_22 = arith.constant 0 : index
    %c0_23 = arith.constant 0 : index
    %c0_24 = arith.constant 0 : index
    %31 = vector.load %arg9[%c0_22, %c0_23, %c0_24] : memref<1x32x1xf32, #tpu.memory_space<vmem>>, vector<1x32x1xf32>
    %32 = vector.shape_cast %31 : vector<1x32x1xf32> to vector<32x1xf32>
    %33 = vector.shape_cast %30 : vector<32x1xf32> to vector<1x32x1xf32>
    tpu.vector_store %arg9[%c0_22, %c0_23, %c0_24], %33 {strides = array<i32>} : memref<1x32x1xf32, #tpu.memory_space<vmem>>, vector<1x32x1xf32>,
    return
  }
  func.func @transform_0(%arg0: i32, %arg1: i32) -> (i32, i32, i32) {
    %c0_i32 = arith.constant 0 : i32
    %c0_i32_0 = arith.constant 0 : i32
    return %arg0, %c0_i32, %arg1 : i32, i32, i32
  }
  func.func @transform_1(%arg0: i32, %arg1: i32) -> (i32, i32, i32) {
    %c0_i32 = arith.constant 0 : i32
    %c0_i32_0 = arith.constant 0 : i32
    %c0_i32_1 = arith.constant 0 : i32
    return %arg0, %c0_i32, %c0_i32_0 : i32, i32, i32
  }
  func.func @transform_2(%arg0: i32, %arg1: i32) -> (i32, i32) {
    %c0_i32 = arith.constant 0 : i32
    %c0_i32_0 = arith.constant 0 : i32
    %c0_i32_1 = arith.constant 0 : i32
    return %c0_i32, %c0_i32_0 : i32, i32
  }
  func.func @transform_3(%arg0: i32, %arg1: i32) -> (i32, i32) {
    %c0_i32 = arith.constant 0 : i32
    %c0_i32_0 = arith.constant 0 : i32
    %c0_i32_1 = arith.constant 0 : i32
    return %c0_i32, %c0_i32_0 : i32, i32
  }
  func.func @transform_4(%arg0: i32, %arg1: i32) -> (i32, i32) {
    %c0_i32 = arith.constant 0 : i32
    %c0_i32_0 = arith.constant 0 : i32
    %c0_i32_1 = arith.constant 0 : i32
    return %c0_i32, %c0_i32_0 : i32, i32
  }
  func.func @transform_5(%arg0: i32, %arg1: i32) -> (i32, i32) {
    %c0_i32 = arith.constant 0 : i32
    %c0_i32_0 = arith.constant 0 : i32
    %c0_i32_1 = arith.constant 0 : i32
    return %c0_i32, %c0_i32_0 : i32, i32
  }
  func.func @transform_6(%arg0: i32, %arg1: i32) -> (i32, i32, i32) {
    %c0_i32 = arith.constant 0 : i32
    %c0_i32_0 = arith.constant 0 : i32
    return %arg0, %c0_i32, %arg1 : i32, i32, i32
  }
  func.func @transform_7(%arg0: i32, %arg1: i32) -> (i32, i32, i32) {
    %c0_i32 = arith.constant 0 : i32
    %c0_i32_0 = arith.constant 0 : i32
    %c0_i32_1 = arith.constant 0 : i32
    return %arg0, %c0_i32, %c0_i32_0 : i32, i32, i32
  }
}

module attributes {stable_mosaic.version = 11 : i64} {
  func.func @_gate_prelu_kernel(%arg0: i32, %arg1: i32, %arg2: memref<1x32x256xf32, #tpu.memory_space<vmem>>, %arg3: memref<1x32x1xf32, #tpu.memory_space<vmem>>, %arg4: memref<32x1xf32, #tpu.memory_space<vmem>>, %arg5: memref<1x32x256xf32, #tpu.memory_space<vmem>>) attributes {dimension_semantics = [#tpu.dimension_semantics<parallel>, #tpu.dimension_semantics<parallel>], iteration_bounds = array<i64: 2, 1>, scalar_prefetch = 0 : i64, scratch_operands = 0 : i64, tpu.core_type = #tpu.core_type<tc>, window_params = [{transform_indices = @transform_0, window_bounds = array<i64: 1, 32, 256>}, {transform_indices = @transform_1, window_bounds = array<i64: 1, 32, 1>}, {pipeline_mode = #tpu.pipeline_mode<synchronous>, transform_indices = @transform_2, window_bounds = array<i64: 32, 1>}, {transform_indices = @transform_3, window_bounds = array<i64: 1, 32, 256>}]} {
    %c0 = arith.constant 0 : index
    %c0_0 = arith.constant 0 : index
    %c0_1 = arith.constant 0 : index
    %0 = vector.load %arg2[%c0, %c0_0, %c0_1] : memref<1x32x256xf32, #tpu.memory_space<vmem>>, vector<1x32x256xf32>
    %1 = vector.shape_cast %0 : vector<1x32x256xf32> to vector<32x256xf32>
    %c0_2 = arith.constant 0 : index
    %c0_3 = arith.constant 0 : index
    %c0_4 = arith.constant 0 : index
    %2 = vector.load %arg3[%c0_2, %c0_3, %c0_4] : memref<1x32x1xf32, #tpu.memory_space<vmem>>, vector<1x32x1xf32>
    %3 = vector.shape_cast %2 : vector<1x32x1xf32> to vector<32x1xf32>
    %4 = vector.broadcast %3 : vector<32x1xf32> to vector<32x256xf32>
    %5 = arith.mulf %1, %4 : vector<32x256xf32>
    %cst = arith.constant 0.000000e+00 : f32
    %6 = vector.broadcast %cst : f32 to vector<32x256xf32>
    %7 = arith.cmpf oge, %5, %6 : vector<32x256xf32>
    %c0_5 = arith.constant 0 : index
    %c0_6 = arith.constant 0 : index
    %8 = vector.load %arg4[%c0_5, %c0_6] : memref<32x1xf32, #tpu.memory_space<vmem>>, vector<32x1xf32>
    %9 = vector.broadcast %8 : vector<32x1xf32> to vector<32x256xf32>
    %10 = arith.mulf %9, %5 : vector<32x256xf32>
    %11 = arith.select %7, %5, %10 : vector<32x256xi1>, vector<32x256xf32>
    %c0_7 = arith.constant 0 : index
    %c0_8 = arith.constant 0 : index
    %c0_9 = arith.constant 0 : index
    %12 = vector.load %arg5[%c0_7, %c0_8, %c0_9] : memref<1x32x256xf32, #tpu.memory_space<vmem>>, vector<1x32x256xf32>
    %13 = vector.shape_cast %12 : vector<1x32x256xf32> to vector<32x256xf32>
    %14 = vector.shape_cast %11 : vector<32x256xf32> to vector<1x32x256xf32>
    tpu.vector_store %arg5[%c0_7, %c0_8, %c0_9], %14 {strides = array<i32>} : memref<1x32x256xf32, #tpu.memory_space<vmem>>, vector<1x32x256xf32>,
    return
  }
  func.func @transform_0(%arg0: i32, %arg1: i32) -> (i32, i32, i32) {
    %c0_i32 = arith.constant 0 : i32
    %c0_i32_0 = arith.constant 0 : i32
    return %arg0, %c0_i32, %arg1 : i32, i32, i32
  }
  func.func @transform_1(%arg0: i32, %arg1: i32) -> (i32, i32, i32) {
    %c0_i32 = arith.constant 0 : i32
    %c0_i32_0 = arith.constant 0 : i32
    %c0_i32_1 = arith.constant 0 : i32
    return %arg0, %c0_i32, %c0_i32_0 : i32, i32, i32
  }
  func.func @transform_2(%arg0: i32, %arg1: i32) -> (i32, i32) {
    %c0_i32 = arith.constant 0 : i32
    %c0_i32_0 = arith.constant 0 : i32
    %c0_i32_1 = arith.constant 0 : i32
    return %c0_i32, %c0_i32_0 : i32, i32
  }
  func.func @transform_3(%arg0: i32, %arg1: i32) -> (i32, i32, i32) {
    %c0_i32 = arith.constant 0 : i32
    %c0_i32_0 = arith.constant 0 : i32
    return %arg0, %c0_i32, %arg1 : i32, i32, i32
  }
}

</mosaic_0001>

<llo_original>
// kernel: encoder_block2.3
$region0: #{encoder_block2.3}
  #allocation0 [shape = 'u32[]', space=smem, size = 0x4, offset = 0x4, fixed_abs, tag = 'smem constant byte address 0x4 - core index']
  #allocation1 [shape = 'u32[144,128]{1,0:T(1,128)}', space=vmem, size = 0x12000, scoped, tag = 'internal scratch']
  %s0 = inlined_call_operand.vmem [shape: f32[2,16,256], index: 0, kind: input, shape index: {}]
  %s1 = inlined_call_operand.vmem [shape: f32[16,7], index: 1, kind: input, shape index: {}]
  %s2 = inlined_call_operand.vmem [shape: f32[16,7], index: 2, kind: input, shape index: {}]
  %s3 = inlined_call_operand.vmem [shape: f32[16,1], index: 3, kind: input, shape index: {}]
  %s4 = inlined_call_operand.vmem [shape: f32[16,1], index: 4, kind: input, shape index: {}]
  %s5 = inlined_call_operand.vmem [shape: f32[16,1], index: 5, kind: input, shape index: {}]
  %s6 = inlined_call_operand.vmem [shape: s32[1,256], index: 6, kind: input, shape index: {}]
  %s7 = inlined_call_operand.vmem [shape: f32[2,16,256], index: 7, kind: output, shape index: {0}]
  %s8 = inlined_call_operand.vmem [shape: f32[2,1,16], index: 8, kind: output, shape index: {1}]
  %9 = xla_tuple %s7, %s8
  %s10 = sld [smem:[#allocation0]]
  $region69: #{encoder_block2.3} parent=0
    _
  %s12 = ssub.s32 1, %s10
  %s13 = scalar_select 0, %s12, %s10
  loop: start=0, step=1, limit=4
  $region2: #{encoder_block2.3} parent=0 // loop_pre_header
    _
  $region3: #{encoder_block2.3} parent=0 // loop_header
    %s15 = sphi 0, %s19
    %p16 = scmp.ge.s32.totalorder %s15, 4
    %s25 = sphi 0, %s27
    %s28 = sphi 0, %s25
    %s29 = sphi 0, %s28
    %s45 = sphi 0, %s29
    %s49 = sphi 0, %s49
    %s51 = sphi 0, %s49
    %s52 = sphi 0, %s51
    %s66 = sphi 0, %s52
    %s70 = sphi 0, %s70
    %s72 = sphi 0, %s70
    %s73 = sphi 0, %s72
    %s87 = sphi 0, %s73
    %s91 = sphi 0, %s91
    %s93 = sphi 0, %s91
    %s94 = sphi 0, %s93
    %s108 = sphi 0, %s94
    %s112 = sphi 0, %s112
    %s114 = sphi 0, %s112
    %s115 = sphi 0, %s114
    %s129 = sphi 0, %s115
    %s133 = sphi 0, %s133
    %s135 = sphi 0, %s133
    %s136 = sphi 0, %s135
    %s150 = sphi 0, %s136
    %s154 = sphi 0, %s154
    %s156 = sphi 0, %s154
    %s157 = sphi 0, %s156
    %s171 = sphi 0, %s157
    %s177 = sphi 0, %s179
    %s180 = sphi 0, %s177
    %s181 = sphi 0, %s180
    %s197 = sphi 0, %s181
    %s203 = sphi 0, %s205
    %s206 = sphi 0, %s203
    %s207 = sphi 0, %s206
    %s223 = sphi 0, %s207
  $region4: #{encoder_block2.3} parent=0 // loop_header_branch
    %18 = sbr.rel (%p16) target = $region8
  $region5: #{encoder_block2.3} parent=0 // loop_body
    %s20 = ssub.s32 %s15, 1
    %s21 = ssub.s32 %s15, 2
    %s22 = sadd.s32 %s15, 1
    %s23 = ssub.s32 %s15, %s22
    %p24 = scmp.eq.s32.totalorder %s23, 0
    %s26 = sadd.s32 %s25, 1
    %s27 = scalar_select %p24, %s25, %s26
    %p30 = pneg %p24
    %p31 = scmp.eq.s32.totalorder %s15, 1
    %p32 = por %p30, %p31
    %p33 = scmp.ne.s32.totalorder %s25, %s28
    %p34 = scmp.eq.s32.totalorder %s15, 0
    %p35 = por %p33, %p34
    %p36 = scmp.ne.s32.totalorder %s25, %s28
    %p37 = scmp.eq.s32.totalorder %s20, 1
    %p38 = por %p36, %p37
    %p39 = scmp.ne.s32.totalorder %s28, %s29
    %p40 = scmp.eq.s32.totalorder %s20, 0
    %p41 = por %p39, %p40
    %p42 = scmp.ne.s32.totalorder %s28, %s29
    %p43 = scmp.eq.s32.totalorder %s21, 1
    %p44 = por %p42, %p43
    %p46 = scmp.ne.s32.totalorder %s29, %s45
    %p47 = scmp.eq.s32.totalorder %s21, 0
    %p48 = por %p46, %p47
    %s50 = sadd.s32 %s49, 1
    %p53 = scmp.eq.s32.totalorder %s15, 1
    %p54 = scmp.ne.s32.totalorder %s49, %s51
    %p55 = scmp.eq.s32.totalorder %s15, 0
    %p56 = por %p54, %p55
    %p57 = scmp.ne.s32.totalorder %s49, %s51
    %p58 = scmp.eq.s32.totalorder %s20, 1
    %p59 = por %p57, %p58
    %p60 = scmp.ne.s32.totalorder %s51, %s52
    %p61 = scmp.eq.s32.totalorder %s20, 0
    %p62 = por %p60, %p61
    %p63 = scmp.ne.s32.totalorder %s51, %s52
    %p64 = scmp.eq.s32.totalorder %s21, 1
    %p65 = por %p63, %p64
    %p67 = scmp.ne.s32.totalorder %s52, %s66
    %p68 = scmp.eq.s32.totalorder %s21, 0
    %p69 = por %p67, %p68
    %s71 = sadd.s32 %s70, 1
    %p74 = scmp.eq.s32.totalorder %s15, 1
    %p75 = scmp.ne.s32.totalorder %s70, %s72
    %p76 = scmp.eq.s32.totalorder %s15, 0
    %p77 = por %p75, %p76
    %p78 = scmp.ne.s32.totalorder %s70, %s72
    %p79 = scmp.eq.s32.totalorder %s20, 1
    %p80 = por %p78, %p79
    %p81 = scmp.ne.s32.totalorder %s72, %s73
    %p82 = scmp.eq.s32.totalorder %s20, 0
    %p83 = por %p81, %p82
    %p84 = scmp.ne.s32.totalorder %s72, %s73
    %p85 = scmp.eq.s32.totalorder %s21, 1
    %p86 = por %p84, %p85
    %p88 = scmp.ne.s32.totalorder %s73, %s87
    %p89 = scmp.eq.s32.totalorder %s21, 0
    %p90 = por %p88, %p89
    %s92 = sadd.s32 %s91, 1
    %p95 = scmp.eq.s32.totalorder %s15, 1
    %p96 = scmp.ne.s32.totalorder %s91, %s93
    %p97 = scmp.eq.s32.totalorder %s15, 0
    %p98 = por %p96, %p97
    %p99 = scmp.ne.s32.totalorder %s91, %s93
    %p100 = scmp.eq.s32.totalorder %s20, 1
    %p101 = por %p99, %p100
    %p102 = scmp.ne.s32.totalorder %s93, %s94
    %p103 = scmp.eq.s32.totalorder %s20, 0
    %p104 = por %p102, %p103
    %p105 = scmp.ne.s32.totalorder %s93, %s94
    %p106 = scmp.eq.s32.totalorder %s21, 1
    %p107 = por %p105, %p106
    %p109 = scmp.ne.s32.totalorder %s94, %s108
    %p110 = scmp.eq.s32.totalorder %s21, 0
    %p111 = por %p109, %p110
    %s113 = sadd.s32 %s112, 1
    %p116 = scmp.eq.s32.totalorder %s15, 1
    %p117 = scmp.ne.s32.totalorder %s112, %s114
    %p118 = scmp.eq.s32.totalorder %s15, 0
    %p119 = por %p117, %p118
    %p120 = scmp.ne.s32.totalorder %s112, %s114
    %p121 = scmp.eq.s32.totalorder %s20, 1
    %p122 = por %p120, %p121
    %p123 = scmp.ne.s32.totalorder %s114, %s115
    %p124 = scmp.eq.s32.totalorder %s20, 0
    %p125 = por %p123, %p124
    %p126 = scmp.ne.s32.totalorder %s114, %s115
    %p127 = scmp.eq.s32.totalorder %s21, 1
    %p128 = por %p126, %p127
    %p130 = scmp.ne.s32.totalorder %s115, %s129
    %p131 = scmp.eq.s32.totalorder %s21, 0
    %p132 = por %p130, %p131
    %s134 = sadd.s32 %s133, 1
    %p137 = scmp.eq.s32.totalorder %s15, 1
    %p138 = scmp.ne.s32.totalorder %s133, %s135
    %p139 = scmp.eq.s32.totalorder %s15, 0
    %p140 = por %p138, %p139
    %p141 = scmp.ne.s32.totalorder %s133, %s135
    %p142 = scmp.eq.s32.totalorder %s20, 1
    %p143 = por %p141, %p142
    %p144 = scmp.ne.s32.totalorder %s135, %s136
    %p145 = scmp.eq.s32.totalorder %s20, 0
    %p146 = por %p144, %p145
    %p147 = scmp.ne.s32.totalorder %s135, %s136
    %p148 = scmp.eq.s32.totalorder %s21, 1
    %p149 = por %p147, %p148
    %p151 = scmp.ne.s32.totalorder %s136, %s150
    %p152 = scmp.eq.s32.totalorder %s21, 0
    %p153 = por %p151, %p152
    %s155 = sadd.s32 %s154, 1
    %p158 = scmp.eq.s32.totalorder %s15, 1
    %p159 = scmp.ne.s32.totalorder %s154, %s156
    %p160 = scmp.eq.s32.totalorder %s15, 0
    %p161 = por %p159, %p160
    %p162 = scmp.ne.s32.totalorder %s154, %s156
    %p163 = scmp.eq.s32.totalorder %s20, 1
    %p164 = por %p162, %p163
    %p165 = scmp.ne.s32.totalorder %s156, %s157
    %p166 = scmp.eq.s32.totalorder %s20, 0
    %p167 = por %p165, %p166
    %p168 = scmp.ne.s32.totalorder %s156, %s157
    %p169 = scmp.eq.s32.totalorder %s21, 1
    %p170 = por %p168, %p169
    %p172 = scmp.ne.s32.totalorder %s157, %s171
    %p173 = scmp.eq.s32.totalorder %s21, 0
    %p174 = por %p172, %p173
    %s175 = ssub.s32 %s15, %s22
    %p176 = scmp.eq.s32.totalorder %s175, 0
    %s178 = sadd.s32 %s177, 1
    %s179 = scalar_select %p176, %s177, %s178
    %p182 = pneg %p176
    %p183 = scmp.eq.s32.totalorder %s15, 1
    %p184 = por %p182, %p183
    %p185 = scmp.ne.s32.totalorder %s177, %s180
    %p186 = scmp.eq.s32.totalorder %s15, 0
    %p187 = por %p185, %p186
    %p188 = scmp.ne.s32.totalorder %s177, %s180
    %p189 = scmp.eq.s32.totalorder %s20, 1
    %p190 = por %p188, %p189
    %p191 = scmp.ne.s32.totalorder %s180, %s181
    %p192 = scmp.eq.s32.totalorder %s20, 0
    %p193 = por %p191, %p192
    %p194 = scmp.ne.s32.totalorder %s180, %s181
    %p195 = scmp.eq.s32.totalorder %s21, 1
    %p196 = por %p194, %p195
    %p198 = scmp.ne.s32.totalorder %s181, %s197
    %p199 = scmp.eq.s32.totalorder %s21, 0
    %p200 = por %p198, %p199
    %s201 = ssub.s32 %s15, %s22
    %p202 = scmp.eq.s32.totalorder %s201, 0
    %s204 = sadd.s32 %s203, 1
    %s205 = scalar_select %p202, %s203, %s204
    %p208 = pneg %p202
    %p209 = scmp.eq.s32.totalorder %s15, 1
    %p210 = por %p208, %p209
    %p211 = scmp.ne.s32.totalorder %s203, %s206
    %p212 = scmp.eq.s32.totalorder %s15, 0
    %p213 = por %p211, %p212
    %p214 = scmp.ne.s32.totalorder %s203, %s206
    %p215 = scmp.eq.s32.totalorder %s20, 1
    %p216 = por %p214, %p215
    %p217 = scmp.ne.s32.totalorder %s206, %s207
    %p218 = scmp.eq.s32.totalorder %s20, 0
    %p219 = por %p217, %p218
    %p220 = scmp.ne.s32.totalorder %s206, %s207
    %p221 = scmp.eq.s32.totalorder %s21, 1
    %p222 = por %p220, %p221
    %p224 = scmp.ne.s32.totalorder %s207, %s223
    %p225 = scmp.eq.s32.totalorder %s21, 0
    %p226 = por %p224, %p225
    %p227 = scmp.le.s32.totalorder 1, %s15
    %p228 = scmp.lt.s32.totalorder %s15, 3
    %p229 = pnand %p227, %p228
    %p230 = pneg %p229
    // Predicated region
    $region9: #{encoder_block2.3} parent=5 // pred_check
      _
    $region10: #{encoder_block2.3} parent=5 // pred_check_branch
      %232 = sbr.rel (%p229) target = $region12
    $region11: #{encoder_block2.3} parent=5 // pred_region
      %s233 = ssub.s32 %s15, 1
      // Predicated region
      $region13: #{encoder_block2.3} parent=11 // pred_check
        %p234 = pneg %p62
      $region14: #{encoder_block2.3} parent=11 // pred_check_branch
        %236 = sbr.rel (%p234) target = $region16
      $region15: #{encoder_block2.3} parent=11 // pred_region
        _
      $region16: #{encoder_block2.3} parent=11 // pred_fallthru
        _
      // Predicated region
      $region17: #{encoder_block2.3} parent=11 // pred_check
        %p237 = pneg %p83
      $region18: #{encoder_block2.3} parent=11 // pred_check_branch
        %239 = sbr.rel (%p237) target = $region20
      $region19: #{encoder_block2.3} parent=11 // pred_region
        _
      $region20: #{encoder_block2.3} parent=11 // pred_fallthru
        _
      // Predicated region
      $region21: #{encoder_block2.3} parent=11 // pred_check
        %p240 = pneg %p104
      $region22: #{encoder_block2.3} parent=11 // pred_check_branch
        %242 = sbr.rel (%p240) target = $region24
      $region23: #{encoder_block2.3} parent=11 // pred_region
        _
      $region24: #{encoder_block2.3} parent=11 // pred_fallthru
        _
      // Predicated region
      $region25: #{encoder_block2.3} parent=11 // pred_check
        %p243 = pneg %p125
      $region26: #{encoder_block2.3} parent=11 // pred_check_branch
        %245 = sbr.rel (%p243) target = $region28
      $region27: #{encoder_block2.3} parent=11 // pred_region
        _
      $region28: #{encoder_block2.3} parent=11 // pred_fallthru
        _
      // Predicated region
      $region29: #{encoder_block2.3} parent=11 // pred_check
        %p246 = pneg %p146
      $region30: #{encoder_block2.3} parent=11 // pred_check_branch
        %248 = sbr.rel (%p246) target = $region32
      $region31: #{encoder_block2.3} parent=11 // pred_region
        _
      $region32: #{encoder_block2.3} parent=11 // pred_fallthru
        _
      // Predicated region
      $region33: #{encoder_block2.3} parent=11 // pred_check
        %p249 = pneg %p167
      $region34: #{encoder_block2.3} parent=11 // pred_check_branch
        %251 = sbr.rel (%p249) target = $region36
      $region35: #{encoder_block2.3} parent=11 // pred_region
        _
      $region36: #{encoder_block2.3} parent=11 // pred_fallthru
        _
    $region12: #{encoder_block2.3} parent=5 // pred_fallthru
      _
    %p252 = scmp.lt.s32.totalorder %s15, 2
    // Predicated region
    $region37: #{encoder_block2.3} parent=5 // pred_check
      %p253 = pneg %p252
    $region38: #{encoder_block2.3} parent=5 // pred_check_branch
      %255 = sbr.rel (%p253) target = $region40
    $region39: #{encoder_block2.3} parent=5 // pred_region
      // Predicated region
      $region41: #{encoder_block2.3} parent=39 // pred_check
        %p256 = pneg %p35
      $region42: #{encoder_block2.3} parent=39 // pred_check_branch
        %258 = sbr.rel (%p256) target = $region44
      $region43: #{encoder_block2.3} parent=39 // pred_region
        %p259 = scmp.lt.s32.totalorder %s15, 1
        %s260 = scalar_select %p259, %s15, 1
        %s261 = smul.addr %s260, 4
        %s262 = smul.addr %s261, 8
        %s263 = scalar_lea.vmem %s0, %s262
      $region44: #{encoder_block2.3} parent=39 // pred_fallthru
        _
    $region40: #{encoder_block2.3} parent=5 // pred_fallthru
      _
    %p264 = scmp.le.s32.totalorder 1, %s15
    %p265 = scmp.lt.s32.totalorder %s15, 3
    %p266 = pnand %p264, %p265
    %p267 = pneg %p266
    // Predicated region
    $region45: #{encoder_block2.3} parent=5 // pred_check
      _
    $region46: #{encoder_block2.3} parent=5 // pred_check_branch
      %269 = sbr.rel (%p266) target = $region48
    $region47: #{encoder_block2.3} parent=5 // pred_region
      %s270 = ssub.s32 %s15, 1
      %p271 = scmp.lt.s32.totalorder %s20, 1
      %s272 = scalar_select %p271, %s20, 1
      %s273 = smul.addr %s272, 4
      %s274 = smul.addr %s273, 8
      %s275 = scalar_lea.vmem %s0, %s274
      %p276 = pneg %p41
      %p277 = pneg %p38
      %p278 = pneg %p62
      %p279 = pneg %p59
      %p280 = pneg %p83
      %p281 = pneg %p80
      %p282 = pneg %p104
      %p283 = pneg %p101
      %p284 = pneg %p125
      %p285 = pneg %p122
      %p286 = pneg %p146
      %p287 = pneg %p143
      %p288 = pneg %p167
      %p289 = pneg %p164
      %p290 = pneg %p193
      %p291 = pneg %p190
      %p292 = scmp.lt.s32.totalorder %s20, 1
      %s293 = scalar_select %p292, %s20, 1
      %s294 = smul.addr %s293, 4
      %s295 = smul.addr %s294, 8
      %s296 = scalar_lea.vmem %s7, %s295
      %p297 = pneg %p219
      %p298 = pneg %p216
      %p299 = scmp.lt.s32.totalorder %s20, 1
      %s300 = scalar_select %p299, %s20, 1
      %s301 = scalar_lea.vmem %s8, %s300
      %p302 = scmp.lt.s32.totalorder %s20, 1
      %s303 = scalar_select %p302, %s20, 1
      %s304 = smul.addr %s303, 4
      %s305 = smul.addr %s304, 8
      %s306 = scalar_lea.vmem %s0, %s305
      %p307 = scmp.lt.s32.totalorder %s20, 1
      %s308 = scalar_select %p307, %s20, 1
      %s309 = smul.addr %s308, 4
      %s310 = smul.addr %s309, 8
      %s311 = scalar_lea.vmem %s7, %s310
      %p312 = scmp.lt.s32.totalorder %s20, 1
      %s313 = scalar_select %p312, %s20, 1
      %s314 = scalar_lea.vmem %s8, %s313
      %v315 = vld [vmem:[%s306] sm:$0xff]
      %v316 = vld [vmem:[%s306 + $0x8] sm:$0xff]
      %v317 = vld [vmem:[%s306 + $0x10] sm:$0xff]
      %v318 = vld [vmem:[%s306 + $0x18] sm:$0xff]
      %v319 = vld [vmem:[%s1] sm:$0xff]
      %v320 = vld [vmem:[%s1 + $0x8] sm:$0xff]
      %v321 = vld [vmem:[%s2] sm:$0xff]
      %v322 = vld [vmem:[%s2 + $0x8] sm:$0xff]
      %v323 = vld [vmem:[%s6] sm:$0x3]
      %v324 = vld [vmem:[%s3] sm:$0xff]
      %v325 = vld [vmem:[%s3 + $0x8] sm:$0xff]
      %327 = vset.pattern.permute.xlu0 0
      %328 = vperm.xlu0 %327, %v324
      %v329 = vpop.permute.xlu0 %328
      %332 = vset.pattern.permute.xlu0 0
      %333 = vperm.xlu0 %332, %v325
      %v334 = vpop.permute.xlu0 %333
      %v336 = vadd.f32 %v315, %v329
      %v337 = vadd.f32 %v316, %v329
      %v338 = vadd.f32 %v317, %v334
      %v339 = vadd.f32 %v318, %v334
      %341 = vset.pattern.permute.xlu0 0
      %342 = vperm.xlu0 %341, %v319
      %v343 = vpop.permute.xlu0 %342
      %346 = vset.pattern.permute.xlu0 0
      %347 = vperm.xlu0 %346, %v320
      %v348 = vpop.permute.xlu0 %347
      %v350 = vmul.f32 %v343, 0.0
      %v351 = vmul.f32 %v343, %v315
      %v352 = vmul.f32 %v343, %v316
      %v353 = vmul.f32 %v348, 0.0
      %v354 = vmul.f32 %v348, %v317
      %v355 = vmul.f32 %v348, %v318
      %362 = vrot.lane.b32.xlu0 %v350, 48
      %v363 = vpop.permute.xlu0 %362
      %364 = vrot.lane.b32.xlu0 %v351, 48
      %v365 = vpop.permute.xlu0 %364
      %366 = vrot.lane.b32.xlu0 %v352, 48
      %v367 = vpop.permute.xlu0 %366
      %368 = vrot.lane.b32.xlu0 %v353, 48
      %v369 = vpop.permute.xlu0 %368
      %370 = vrot.lane.b32.xlu0 %v354, 48
      %v371 = vpop.permute.xlu0 %370
      %372 = vrot.lane.b32.xlu0 %v355, 48
      %v373 = vpop.permute.xlu0 %372
      %vm374 = vcmask 392192
      %v375 = vsel %vm374, %v363, %v365
      %v376 = vsel %vm374, %v365, %v367
      %v377 = vsel %vm374, %v369, %v371
      %v378 = vsel %vm374, %v371, %v373
      %v383 = vadd.f32 %v336, %v375
      %v384 = vadd.f32 %v337, %v376
      %v385 = vadd.f32 %v338, %v377
      %v386 = vadd.f32 %v339, %v378
      %387 = vset.pattern.permute.xlu0 1
      %388 = vperm.xlu0 %387, %v319
      %v389 = vpop.permute.xlu0 %388
      %391 = vset.pattern.permute.xlu0 1
      %392 = vperm.xlu0 %391, %v320
      %v393 = vpop.permute.xlu0 %392
      %v395 = vmul.f32 %v389, 0.0
      %v396 = vmul.f32 %v389, %v315
      %v397 = vmul.f32 %v389, %v316
      %v398 = vmul.f32 %v393, 0.0
      %v399 = vmul.f32 %v393, %v317
      %v400 = vmul.f32 %v393, %v318
      %407 = vrot.lane.b32.xlu0 %v395, 32
      %v408 = vpop.permute.xlu0 %407
      %409 = vrot.lane.b32.xlu0 %v396, 32
      %v410 = vpop.permute.xlu0 %409
      %411 = vrot.lane.b32.xlu0 %v397, 32
      %v412 = vpop.permute.xlu0 %411
      %413 = vrot.lane.b32.xlu0 %v398, 32
      %v414 = vpop.permute.xlu0 %413
      %415 = vrot.lane.b32.xlu0 %v399, 32
      %v416 = vpop.permute.xlu0 %415
      %417 = vrot.lane.b32.xlu0 %v400, 32
      %v418 = vpop.permute.xlu0 %417
      %vm419 = vcmask 261120
      %v420 = vsel %vm419, %v408, %v410
      %v421 = vsel %vm419, %v410, %v412
      %v422 = vsel %vm419, %v414, %v416
      %v423 = vsel %vm419, %v416, %v418
      %v428 = vadd.f32 %v383, %v420
      %v429 = vadd.f32 %v384, %v421
      %v430 = vadd.f32 %v385, %v422
      %v431 = vadd.f32 %v386, %v423
      %432 = vset.pattern.permute.xlu0 2
      %433 = vperm.xlu0 %432, %v319
      %v434 = vpop.permute.xlu0 %433
      %436 = vset.pattern.permute.xlu0 2
      %437 = vperm.xlu0 %436, %v320
      %v438 = vpop.permute.xlu0 %437
      %v440 = vmul.f32 %v434, 0.0
      %v441 = vmul.f32 %v434, %v315
      %v442 = vmul.f32 %v434, %v316
      %v443 = vmul.f32 %v438, 0.0
      %v444 = vmul.f32 %v438, %v317
      %v445 = vmul.f32 %v438, %v318
      %452 = vrot.lane.b32.xlu0 %v440, 16
      %v453 = vpop.permute.xlu0 %452
      %454 = vrot.lane.b32.xlu0 %v441, 16
      %v455 = vpop.permute.xlu0 %454
      %456 = vrot.lane.b32.xlu0 %v442, 16
      %v457 = vpop.permute.xlu0 %456
      %458 = vrot.lane.b32.xlu0 %v443, 16
      %v459 = vpop.permute.xlu0 %458
      %460 = vrot.lane.b32.xlu0 %v444, 16
      %v461 = vpop.permute.xlu0 %460
      %462 = vrot.lane.b32.xlu0 %v445, 16
      %v463 = vpop.permute.xlu0 %462
      %vm464 = vcmask 130048
      %v465 = vsel %vm464, %v453, %v455
      %v466 = vsel %vm464, %v455, %v457
      %v467 = vsel %vm464, %v459, %v461
      %v468 = vsel %vm464, %v461, %v463
      %v473 = vadd.f32 %v428, %v465
      %v474 = vadd.f32 %v429, %v466
      %v475 = vadd.f32 %v430, %v467
      %v476 = vadd.f32 %v431, %v468
      %477 = vset.pattern.permute.xlu0 3
      %478 = vperm.xlu0 %477, %v319
      %v479 = vpop.permute.xlu0 %478
      %481 = vset.pattern.permute.xlu0 3
      %482 = vperm.xlu0 %481, %v320
      %v483 = vpop.permute.xlu0 %482
      %v485 = vmul.f32 %v479, %v315
      %v486 = vmul.f32 %v479, %v316
      %v487 = vmul.f32 %v483, %v317
      %v488 = vmul.f32 %v483, %v318
      %v489 = vadd.f32 %v473, %v485
      %v490 = vadd.f32 %v474, %v486
      %v491 = vadd.f32 %v475, %v487
      %v492 = vadd.f32 %v476, %v488
      %493 = vset.pattern.permute.xlu0 4
      %494 = vperm.xlu0 %493, %v319
      %v495 = vpop.permute.xlu0 %494
      %497 = vset.pattern.permute.xlu0 4
      %498 = vperm.xlu0 %497, %v320
      %v499 = vpop.permute.xlu0 %498
      %v501 = vmul.f32 %v495, %v315
      %v502 = vmul.f32 %v495, %v316
      %v503 = vmul.f32 %v495, 0.0
      %v504 = vmul.f32 %v499, %v317
      %v505 = vmul.f32 %v499, %v318
      %v506 = vmul.f32 %v499, 0.0
      %513 = vrot.lane.b32.xlu0 %v501, 112
      %v514 = vpop.permute.xlu0 %513
      %515 = vrot.lane.b32.xlu0 %v502, 112
      %v516 = vpop.permute.xlu0 %515
      %517 = vrot.lane.b32.xlu0 %v503, 112
      %v518 = vpop.permute.xlu0 %517
      %519 = vrot.lane.b32.xlu0 %v504, 112
      %v520 = vpop.permute.xlu0 %519
      %521 = vrot.lane.b32.xlu0 %v505, 112
      %v522 = vpop.permute.xlu0 %521
      %523 = vrot.lane.b32.xlu0 %v506, 112
      %v524 = vpop.permute.xlu0 %523
      %vm525 = vcmask 916480
      %v526 = vsel %vm525, %v514, %v516
      %v527 = vsel %vm525, %v516, %v518
      %v528 = vsel %vm525, %v520, %v522
      %v529 = vsel %vm525, %v522, %v524
      %v534 = vadd.f32 %v489, %v526
      %v535 = vadd.f32 %v490, %v527
      %v536 = vadd.f32 %v491, %v528
      %v537 = vadd.f32 %v492, %v529
      %538 = vset.pattern.permute.xlu0 5
      %539 = vperm.xlu0 %538, %v319
      %v540 = vpop.permute.xlu0 %539
      %542 = vset.pattern.permute.xlu0 5
      %543 = vperm.xlu0 %542, %v320
      %v544 = vpop.permute.xlu0 %543
      %v546 = vmul.f32 %v540, %v315
      %v547 = vmul.f32 %v540, %v316
      %v548 = vmul.f32 %v540, 0.0
      %v549 = vmul.f32 %v544, %v317
      %v550 = vmul.f32 %v544, %v318
      %v551 = vmul.f32 %v544, 0.0
      %558 = vrot.lane.b32.xlu0 %v546, 96
      %v559 = vpop.permute.xlu0 %558
      %560 = vrot.lane.b32.xlu0 %v547, 96
      %v561 = vpop.permute.xlu0 %560
      %562 = vrot.lane.b32.xlu0 %v548, 96
      %v563 = vpop.permute.xlu0 %562
      %564 = vrot.lane.b32.xlu0 %v549, 96
      %v565 = vpop.permute.xlu0 %564
      %566 = vrot.lane.b32.xlu0 %v550, 96
      %v567 = vpop.permute.xlu0 %566
      %568 = vrot.lane.b32.xlu0 %v551, 96
      %v569 = vpop.permute.xlu0 %568
      %vm570 = vcmask 785408
      %v571 = vsel %vm570, %v559, %v561
      %v572 = vsel %vm570, %v561, %v563
      %v573 = vsel %vm570, %v565, %v567
      %v574 = vsel %vm570, %v567, %v569
      %v579 = vadd.f32 %v534, %v571
      %v580 = vadd.f32 %v535, %v572
      %v581 = vadd.f32 %v536, %v573
      %v582 = vadd.f32 %v537, %v574
      %583 = vset.pattern.permute.xlu0 6
      %584 = vperm.xlu0 %583, %v319
      %v585 = vpop.permute.xlu0 %584
      %587 = vset.pattern.permute.xlu0 6
      %588 = vperm.xlu0 %587, %v320
      %v589 = vpop.permute.xlu0 %588
      %v591 = vmul.f32 %v585, %v315
      %v592 = vmul.f32 %v585, %v316
      %v593 = vmul.f32 %v585, 0.0
      %v594 = vmul.f32 %v589, %v317
      %v595 = vmul.f32 %v589, %v318
      %v596 = vmul.f32 %v589, 0.0
      %603 = vrot.lane.b32.xlu0 %v591, 80
      %v604 = vpop.permute.xlu0 %603
      %605 = vrot.lane.b32.xlu0 %v592, 80
      %v606 = vpop.permute.xlu0 %605
      %607 = vrot.lane.b32.xlu0 %v593, 80
      %v608 = vpop.permute.xlu0 %607
      %609 = vrot.lane.b32.xlu0 %v594, 80
      %v610 = vpop.permute.xlu0 %609
      %611 = vrot.lane.b32.xlu0 %v595, 80
      %v612 = vpop.permute.xlu0 %611
      %613 = vrot.lane.b32.xlu0 %v596, 80
      %v614 = vpop.permute.xlu0 %613
      %vm615 = vcmask 654336
      %v616 = vsel %vm615, %v604, %v606
      %v617 = vsel %vm615, %v606, %v608
      %v618 = vsel %vm615, %v610, %v612
      %v619 = vsel %vm615, %v612, %v614
      %v624 = vadd.f32 %v579, %v616
      %v625 = vadd.f32 %v580, %v617
      %v626 = vadd.f32 %v581, %v618
      %v627 = vadd.f32 %v582, %v619
      %vm628 = vcmp.ge.s32.totalorder %v323, 3
      %v629 = vsel %vm628, 1, 0
      %v630 = vlaneseq
      %v631 = vshrl.u32 %v630, 7
      %v632 = vsub.s32 0, %v631
      %v633 = vrot.slane %v629, %v632
      %v634 = vlaneseq
      %v635 = vshrl.u32 %v634, 7
      %v636 = vsub.s32 1, %v635
      %v637 = vrot.slane %v629, %v636
      %vm638 = vcmp.eq.s32.totalorder %v633, 1
      %vm639 = vcmp.eq.s32.totalorder %v637, 1
      %645 = vrot.lane.b32.xlu0 0.0, 3
      %v646 = vpop.permute.xlu0 %645
      %647 = vrot.lane.b32.xlu0 %v315, 3
      %v648 = vpop.permute.xlu0 %647
      %649 = vrot.lane.b32.xlu0 %v316, 3
      %v650 = vpop.permute.xlu0 %649
      %651 = vrot.lane.b32.xlu0 %v317, 3
      %v652 = vpop.permute.xlu0 %651
      %653 = vrot.lane.b32.xlu0 %v318, 3
      %v654 = vpop.permute.xlu0 %653
      %vm655 = vcmask 23552
      %v656 = vsel %vm655, %v646, %v648
      %v657 = vsel %vm655, %v648, %v650
      %v658 = vsel %vm655, %v646, %v652
      %v659 = vsel %vm655, %v652, %v654
      %v664 = vsel %vm638, %v656, 0.0
      %v665 = vsel %vm639, %v657, 0.0
      %v666 = vsel %vm638, %v658, 0.0
      %v667 = vsel %vm639, %v659, 0.0
      %669 = vset.pattern.permute.xlu0 0
      %670 = vperm.xlu0 %669, %v321
      %v671 = vpop.permute.xlu0 %670
      %674 = vset.pattern.permute.xlu0 0
      %675 = vperm.xlu0 %674, %v322
      %v676 = vpop.permute.xlu0 %675
      %v678 = vmul.f32 %v671, %v664
      %v679 = vmul.f32 %v671, %v665
      %v680 = vmul.f32 %v676, %v666
      %v681 = vmul.f32 %v676, %v667
      %v682 = vadd.f32 %v624, %v678
      %v683 = vadd.f32 %v625, %v679
      %v684 = vadd.f32 %v626, %v680
      %v685 = vadd.f32 %v627, %v681
      %vm686 = vcmp.ge.s32.totalorder %v323, 2
      %v687 = vsel %vm686, 1, 0
      %v688 = vlaneseq
      %v689 = vshrl.u32 %v688, 7
      %v690 = vsub.s32 0, %v689
      %v691 = vrot.slane %v687, %v690
      %v692 = vlaneseq
      %v693 = vshrl.u32 %v692, 7
      %v694 = vsub.s32 1, %v693
      %v695 = vrot.slane %v687, %v694
      %vm696 = vcmp.eq.s32.totalorder %v691, 1
      %vm697 = vcmp.eq.s32.totalorder %v695, 1
      %698 = vrot.lane.b32.xlu0 0.0, 2
      %v699 = vpop.permute.xlu0 %698
      %700 = vrot.lane.b32.xlu0 %v315, 2
      %v701 = vpop.permute.xlu0 %700
      %702 = vrot.lane.b32.xlu0 %v316, 2
      %v703 = vpop.permute.xlu0 %702
      %704 = vrot.lane.b32.xlu0 %v317, 2
      %v705 = vpop.permute.xlu0 %704
      %706 = vrot.lane.b32.xlu0 %v318, 2
      %v707 = vpop.permute.xlu0 %706
      %vm708 = vcmask 15360
      %v709 = vsel %vm708, %v699, %v701
      %v710 = vsel %vm708, %v701, %v703
      %v711 = vsel %vm708, %v699, %v705
      %v712 = vsel %vm708, %v705, %v707
      %v717 = vsel %vm696, %v709, 0.0
      %v718 = vsel %vm697, %v710, 0.0
      %v719 = vsel %vm696, %v711, 0.0
      %v720 = vsel %vm697, %v712, 0.0
      %721 = vset.pattern.permute.xlu0 1
      %722 = vperm.xlu0 %721, %v321
      %v723 = vpop.permute.xlu0 %722
      %725 = vset.pattern.permute.xlu0 1
      %726 = vperm.xlu0 %725, %v322
      %v727 = vpop.permute.xlu0 %726
      %v729 = vmul.f32 %v723, %v717
      %v730 = vmul.f32 %v723, %v718
      %v731 = vmul.f32 %v727, %v719
      %v732 = vmul.f32 %v727, %v720
      %v733 = vadd.f32 %v682, %v729
      %v734 = vadd.f32 %v683, %v730
      %v735 = vadd.f32 %v684, %v731
      %v736 = vadd.f32 %v685, %v732
      %vm737 = vcmp.ge.s32.totalorder %v323, 1
      %v738 = vsel %vm737, 1, 0
      %v739 = vlaneseq
      %v740 = vshrl.u32 %v739, 7
      %v741 = vsub.s32 0, %v740
      %v742 = vrot.slane %v738, %v741
      %v743 = vlaneseq
      %v744 = vshrl.u32 %v743, 7
      %v745 = vsub.s32 1, %v744
      %v746 = vrot.slane %v738, %v745
      %vm747 = vcmp.eq.s32.totalorder %v742, 1
      %vm748 = vcmp.eq.s32.totalorder %v746, 1
      %749 = vrot.lane.b32.xlu0 0.0, 1
      %v750 = vpop.permute.xlu0 %749
      %751 = vrot.lane.b32.xlu0 %v315, 1
      %v752 = vpop.permute.xlu0 %751
      %753 = vrot.lane.b32.xlu0 %v316, 1
      %v754 = vpop.permute.xlu0 %753
      %755 = vrot.lane.b32.xlu0 %v317, 1
      %v756 = vpop.permute.xlu0 %755
      %757 = vrot.lane.b32.xlu0 %v318, 1
      %v758 = vpop.permute.xlu0 %757
      %vm759 = vcmask 7168
      %v760 = vsel %vm759, %v750, %v752
      %v761 = vsel %vm759, %v752, %v754
      %v762 = vsel %vm759, %v750, %v756
      %v763 = vsel %vm759, %v756, %v758
      %v768 = vsel %vm747, %v760, 0.0
      %v769 = vsel %vm748, %v761, 0.0
      %v770 = vsel %vm747, %v762, 0.0
      %v771 = vsel %vm748, %v763, 0.0
      %772 = vset.pattern.permute.xlu0 2
      %773 = vperm.xlu0 %772, %v321
      %v774 = vpop.permute.xlu0 %773
      %776 = vset.pattern.permute.xlu0 2
      %777 = vperm.xlu0 %776, %v322
      %v778 = vpop.permute.xlu0 %777
      %v780 = vmul.f32 %v774, %v768
      %v781 = vmul.f32 %v774, %v769
      %v782 = vmul.f32 %v778, %v770
      %v783 = vmul.f32 %v778, %v771
      %v784 = vadd.f32 %v733, %v780
      %v785 = vadd.f32 %v734, %v781
      %v786 = vadd.f32 %v735, %v782
      %v787 = vadd.f32 %v736, %v783
      %788 = vset.pattern.permute.xlu0 3
      %789 = vperm.xlu0 %788, %v321
      %v790 = vpop.permute.xlu0 %789
      %792 = vset.pattern.permute.xlu0 3
      %793 = vperm.xlu0 %792, %v322
      %v794 = vpop.permute.xlu0 %793
      %v796 = vmul.f32 %v790, %v315
      %v797 = vmul.f32 %v790, %v316
      %v798 = vmul.f32 %v794, %v317
      %v799 = vmul.f32 %v794, %v318
      %v800 = vadd.f32 %v784, %v796
      %v801 = vadd.f32 %v785, %v797
      %v802 = vadd.f32 %v786, %v798
      %v803 = vadd.f32 %v787, %v799
      %vm804 = vcmp.lt.s32.totalorder %v323, 15
      %v805 = vsel %vm804, 1, 0
      %v806 = vlaneseq
      %v807 = vshrl.u32 %v806, 7
      %v808 = vsub.s32 0, %v807
      %v809 = vrot.slane %v805, %v808
      %v810 = vlaneseq
      %v811 = vshrl.u32 %v810, 7
      %v812 = vsub.s32 1, %v811
      %v813 = vrot.slane %v805, %v812
      %vm814 = vcmp.eq.s32.totalorder %v809, 1
      %vm815 = vcmp.eq.s32.totalorder %v813, 1
      %816 = vrot.lane.b32.xlu0 %v315, 127
      %v817 = vpop.permute.xlu0 %816
      %818 = vrot.lane.b32.xlu0 %v316, 127
      %v819 = vpop.permute.xlu0 %818
      %820 = vrot.lane.b32.xlu0 0.0, 127
      %v821 = vpop.permute.xlu0 %820
      %822 = vrot.lane.b32.xlu0 %v317, 127
      %v823 = vpop.permute.xlu0 %822
      %824 = vrot.lane.b32.xlu0 %v318, 127
      %v825 = vpop.permute.xlu0 %824
      %vm826 = vcmask 1039360
      %v827 = vsel %vm826, %v817, %v819
      %v828 = vsel %vm826, %v819, %v821
      %v829 = vsel %vm826, %v823, %v825
      %v830 = vsel %vm826, %v825, %v821
      %v835 = vsel %vm814, %v827, 0.0
      %v836 = vsel %vm815, %v828, 0.0
      %v837 = vsel %vm814, %v829, 0.0
      %v838 = vsel %vm815, %v830, 0.0
      %839 = vset.pattern.permute.xlu0 4
      %840 = vperm.xlu0 %839, %v321
      %v841 = vpop.permute.xlu0 %840
      %843 = vset.pattern.permute.xlu0 4
      %844 = vperm.xlu0 %843, %v322
      %v845 = vpop.permute.xlu0 %844
      %v847 = vmul.f32 %v841, %v835
      %v848 = vmul.f32 %v841, %v836
      %v849 = vmul.f32 %v845, %v837
      %v850 = vmul.f32 %v845, %v838
      %v851 = vadd.f32 %v800, %v847
      %v852 = vadd.f32 %v801, %v848
      %v853 = vadd.f32 %v802, %v849
      %v854 = vadd.f32 %v803, %v850
      %vm855 = vcmp.lt.s32.totalorder %v323, 14
      %v856 = vsel %vm855, 1, 0
      %v857 = vlaneseq
      %v858 = vshrl.u32 %v857, 7
      %v859 = vsub.s32 0, %v858
      %v860 = vrot.slane %v856, %v859
      %v861 = vlaneseq
      %v862 = vshrl.u32 %v861, 7
      %v863 = vsub.s32 1, %v862
      %v864 = vrot.slane %v856, %v863
      %vm865 = vcmp.eq.s32.totalorder %v860, 1
      %vm866 = vcmp.eq.s32.totalorder %v864, 1
      %867 = vrot.lane.b32.xlu0 %v315, 126
      %v868 = vpop.permute.xlu0 %867
      %869 = vrot.lane.b32.xlu0 %v316, 126
      %v870 = vpop.permute.xlu0 %869
      %871 = vrot.lane.b32.xlu0 0.0, 126
      %v872 = vpop.permute.xlu0 %871
      %873 = vrot.lane.b32.xlu0 %v317, 126
      %v874 = vpop.permute.xlu0 %873
      %875 = vrot.lane.b32.xlu0 %v318, 126
      %v876 = vpop.permute.xlu0 %875
      %vm877 = vcmask 1031168
      %v878 = vsel %vm877, %v868, %v870
      %v879 = vsel %vm877, %v870, %v872
      %v880 = vsel %vm877, %v874, %v876
      %v881 = vsel %vm877, %v876, %v872
      %v886 = vsel %vm865, %v878, 0.0
      %v887 = vsel %vm866, %v879, 0.0
      %v888 = vsel %vm865, %v880, 0.0
      %v889 = vsel %vm866, %v881, 0.0
      %890 = vset.pattern.permute.xlu0 5
      %891 = vperm.xlu0 %890, %v321
      %v892 = vpop.permute.xlu0 %891
      %894 = vset.pattern.permute.xlu0 5
      %895 = vperm.xlu0 %894, %v322
      %v896 = vpop.permute.xlu0 %895
      %v898 = vmul.f32 %v892, %v886
      %v899 = vmul.f32 %v892, %v887
      %v900 = vmul.f32 %v896, %v888
      %v901 = vmul.f32 %v896, %v889
      %v902 = vadd.f32 %v851, %v898
      %v903 = vadd.f32 %v852, %v899
      %v904 = vadd.f32 %v853, %v900
      %v905 = vadd.f32 %v854, %v901
      %vm906 = vcmp.lt.s32.totalorder %v323, 13
      %v907 = vsel %vm906, 1, 0
      %v908 = vlaneseq
      %v909 = vshrl.u32 %v908, 7
      %v910 = vsub.s32 0, %v909
      %v911 = vrot.slane %v907, %v910
      %v912 = vlaneseq
      %v913 = vshrl.u32 %v912, 7
      %v914 = vsub.s32 1, %v913
      %v915 = vrot.slane %v907, %v914
      %vm916 = vcmp.eq.s32.totalorder %v911, 1
      %vm917 = vcmp.eq.s32.totalorder %v915, 1
      %918 = vrot.lane.b32.xlu0 %v315, 125
      %v919 = vpop.permute.xlu0 %918
      %920 = vrot.lane.b32.xlu0 %v316, 125
      %v921 = vpop.permute.xlu0 %920
      %922 = vrot.lane.b32.xlu0 0.0, 125
      %v923 = vpop.permute.xlu0 %922
      %924 = vrot.lane.b32.xlu0 %v317, 125
      %v925 = vpop.permute.xlu0 %924
      %926 = vrot.lane.b32.xlu0 %v318, 125
      %v927 = vpop.permute.xlu0 %926
      %vm928 = vcmask 1022976
      %v929 = vsel %vm928, %v919, %v921
      %v930 = vsel %vm928, %v921, %v923
      %v931 = vsel %vm928, %v925, %v927
      %v932 = vsel %vm928, %v927, %v923
      %v937 = vsel %vm916, %v929, 0.0
      %v938 = vsel %vm917, %v930, 0.0
      %v939 = vsel %vm916, %v931, 0.0
      %v940 = vsel %vm917, %v932, 0.0
      %941 = vset.pattern.permute.xlu0 6
      %942 = vperm.xlu0 %941, %v321
      %v943 = vpop.permute.xlu0 %942
      %945 = vset.pattern.permute.xlu0 6
      %946 = vperm.xlu0 %945, %v322
      %v947 = vpop.permute.xlu0 %946
      %v949 = vmul.f32 %v943, %v937
      %v950 = vmul.f32 %v943, %v938
      %v951 = vmul.f32 %v947, %v939
      %v952 = vmul.f32 %v947, %v940
      %v953 = vadd.f32 %v902, %v949
      %v954 = vadd.f32 %v903, %v950
      %v955 = vadd.f32 %v904, %v951
      %v956 = vadd.f32 %v905, %v952
      %v957 = vld [vmem:[%s4] sm:$0xff]
      %v958 = vld [vmem:[%s4 + $0x8] sm:$0xff]
      %960 = vset.pattern.permute.xlu0 0
      %961 = vperm.xlu0 %960, %v957
      %v962 = vpop.permute.xlu0 %961
      %965 = vset.pattern.permute.xlu0 0
      %966 = vperm.xlu0 %965, %v958
      %v967 = vpop.permute.xlu0 %966
      %v969 = vmul.f32 %v953, %v962
      %v970 = vmul.f32 %v954, %v962
      %v971 = vmul.f32 %v955, %v967
      %v972 = vmul.f32 %v956, %v967
      %v973 = vld [vmem:[%s5] sm:$0xff]
      %v974 = vld [vmem:[%s5 + $0x8] sm:$0xff]
      %976 = vset.pattern.permute.xlu0 0
      %977 = vperm.xlu0 %976, %v973
      %v978 = vpop.permute.xlu0 %977
      %981 = vset.pattern.permute.xlu0 0
      %982 = vperm.xlu0 %981, %v974
      %v983 = vpop.permute.xlu0 %982
      %v985 = vadd.f32 %v969, %v978
      %v986 = vadd.f32 %v970, %v978
      %v987 = vadd.f32 %v971, %v983
      %v988 = vadd.f32 %v972, %v983
      %989 = vst [vmem:[%s311] sm:$0xff] %v985
      %990 = vst [vmem:[%s311 + $0x8] sm:$0xff] %v986
      %991 = vst [vmem:[%s311 + $0x10] sm:$0xff] %v987
      %992 = vst [vmem:[%s311 + $0x18] sm:$0xff] %v988
      %993 = vmatprep.subr.mxu0 0.0
      %994 = vmatpush1.xpose.msra.mxu0 0.0
      %995 = vmatprep.subr.mxu0 0.0
      %996 = vmatpush1.xpose.msra.mxu0 0.0
      %997 = vmatprep.subr.mxu0 0.0
      %998 = vmatpush1.xpose.msra.mxu0 0.0
      %999 = vmatprep.subr.mxu0 0.0
      %1000 = vmatpush1.xpose.msra.mxu0 0.0
      %1001 = vmatprep.subr.mxu0 0.0
      %1002 = vmatpush1.xpose.msra.mxu0 0.0
      %1003 = vmatprep.subr.mxu0 0.0
      %1004 = vmatpush1.xpose.msra.mxu0 0.0
      %1005 = vmatprep.subr.mxu0 0.0
      %1006 = vmatpush1.xpose.msra.mxu0 0.0
      %1007 = vmatprep.subr.mxu0 0.0
      %1008 = vmatpush1.xpose.msra.mxu0 0.0
      %1009 = vmatprep.subr.mxu0 0.0
      %1010 = vmatpush1.xpose.msra.mxu0 0.0
      %1011 = vmatprep.subr.mxu0 0.0
      %1012 = vmatpush1.xpose.msra.mxu0 0.0
      %1013 = vmatprep.subr.mxu0 0.0
      %1014 = vmatpush1.xpose.msra.mxu0 0.0
      %1015 = vmatprep.subr.mxu0 0.0
      %1016 = vmatpush1.xpose.msra.mxu0 0.0
      %1017 = vmatprep.subr.mxu0 0.0
      %1018 = vmatpush1.xpose.msra.mxu0 0.0
      %1019 = vmatprep.subr.mxu0 0.0
      %1020 = vmatpush1.xpose.msra.mxu0 0.0
      %1021 = vmatprep.subr.mxu0 %v988
      %1022 = vmatpush1.xpose.msra.mxu0 %v987
      %1023 = vmatprep.subr.mxu0 %v986
      %1024 = vmatpush1.xpose.msra.mxu0 %v985
      %1025 = vmatprep.subr.mxu0 0.0
      %1026 = vmatpush2.xpose.msra.mxu0 0.0
      %1027 = vmatprep.subr.mxu0 0.0
      %1028 = vmatpush2.xpose.msra.mxu0 0.0
      %1029 = vmatprep.subr.mxu0 0.0
      %1030 = vmatpush2.xpose.msra.mxu0 0.0
      %1031 = vmatprep.subr.mxu0 0.0
      %1032 = vmatpush2.xpose.msra.mxu0 0.0
      %1033 = vmatprep.subr.mxu0 0.0
      %1034 = vmatpush2.xpose.msra.mxu0 0.0
      %1035 = vmatprep.subr.mxu0 0.0
      %1036 = vmatpush2.xpose.msra.mxu0 0.0
      %1037 = vmatprep.subr.mxu0 0.0
      %1038 = vmatpush2.xpose.msra.mxu0 0.0
      %1039 = vmatprep.subr.mxu0 0.0
      %1040 = vmatpush2.xpose.msra.mxu0 0.0
      %1041 = vmatprep.subr.mxu0 0.0
      %1042 = vmatpush2.xpose.msra.mxu0 0.0
      %1043 = vmatprep.subr.mxu0 0.0
      %1044 = vmatpush2.xpose.msra.mxu0 0.0
      %1045 = vmatprep.subr.mxu0 0.0
      %1046 = vmatpush2.xpose.msra.mxu0 0.0
      %1047 = vmatprep.subr.mxu0 0.0
      %1048 = vmatpush2.xpose.msra.mxu0 0.0
      %1049 = vmatprep.subr.mxu0 0.0
      %1050 = vmatpush2.xpose.msra.mxu0 0.0
      %1051 = vmatprep.subr.mxu0 0.0
      %1052 = vmatpush2.xpose.msra.mxu0 0.0
      %1053 = vmatprep.subr.mxu0 0.0
      %1054 = vmatpush2.xpose.msra.mxu0 0.0
      %1055 = vmatprep.subr.mxu0 0.0
      %1056 = vmatpush2.xpose.msra.mxu0 0.0
      %1057 = vmatprep.mubr.f32.mxu0 %v986
      %1058 = vmatmul.mubr.f32.gmra.mxu0 %v985
      %v1059 = vpop.f32.mrf.mxu0
      %v1060 = vadd.f32 0.0, %v1059
      %v1061 = vpop.f32.mrf.mxu0
      %1062 = vmatprep.mubr.f32.mxu0 %v988
      %1063 = vmatmul.mubr.f32.gmra.mxu0 %v987
      %v1064 = vpop.f32.mrf.mxu0
      %v1065 = vadd.f32 0.0, %v1064
      %v1066 = vpop.f32.mrf.mxu0
      %1067 = vdwg.mxu0
      %v1068 = vlaneseq
      %v1069 = vshrl.u32 %v1068, 7
      %v1070 = vadd.s32 %v1069, 8
      %v1071 = vlaneseq
      %v1072 = vand.u32 %v1071, 127
      %vm1073 = vcmp.eq.s32.totalorder %v1069, %v1072
      %vm1074 = vcmp.eq.s32.totalorder %v1070, %v1072
      %v1075 = vsel %vm1073, %v1060, 0.0
      %v1076 = vsel %vm1074, %v1065, 0.0
      %v1077 = vsel %vm464, %v1075, 0.0
      %1078 = vadd.xlane.f32.xlu0 %v1077
      %v1079 = vpop.xlane.xlu0 %1078
      %v1080 = vsel %vm464, %v1076, 0.0
      %1081 = vadd.xlane.f32.xlu0 %v1080
      %v1082 = vpop.xlane.xlu0 %1081
      %v1083 = vadd.f32 %v1077, %v1080
      %v1084 = vrot.slane %v1083, 4
      %v1085 = vadd.f32 %v1083, %v1084
      %v1086 = vrot.slane %v1085, 2
      %v1087 = vadd.f32 %v1085, %v1086
      %v1088 = vrot.slane %v1087, 1
      %v1089 = vadd.f32 %v1087, %v1088
      %v1090 = vmax.f32 %v1079, 1e-24
      %v1091 = vmax.f32 %v1082, 1e-24
      %v1092 = vrsqrt.pop %v1090
      %v1093 = vrsqrt.pop %v1091
      %v1094 = vmax.f32 %v1089, 1e-24
      %v1095 = vrsqrt.pop %v1094
      %v1096 = vmul.f32 %v1060, %v1092
      %v1097 = vmul.f32 %v1065, %v1093
      %v1098 = vmul.f32 %v1096, %v1095
      %v1099 = vmul.f32 %v1097, %v1095
      %vm1100 = vcmp.gt.s32.totalorder %v1072, %v1069
      %vm1101 = vcmp.gt.s32.totalorder %v1072, %v1070
      %v1102 = vsel %vm1100, %v1098, 0.0
      %v1103 = vsel %vm1101, %v1099, 0.0
      %vm1104 = vcmp.lt.f32.partialorder %v1102, 0.5
      %vm1105 = vcmp.lt.f32.partialorder %v1103, 0.5
      %v1106 = vsel %vm1104, 1, 0
      %v1107 = vsel %vm1105, 1, 0
      %v1108 = vcvt.s32.f32 %v1106
      %v1109 = vcvt.s32.f32 %v1107
      %v1110 = vsel %vm464, %v1108, 0.0
      %v1111 = vsel %vm464, %v1109, 0.0
      %v1112 = vadd.f32 %v1110, %v1111
      %v1113 = vrot.slane %v1112, 4
      %v1114 = vadd.f32 %v1112, %v1113
      %v1115 = vrot.slane %v1114, 2
      %v1116 = vadd.f32 %v1114, %v1115
      %v1117 = vrot.slane %v1116, 1
      %v1118 = vadd.f32 %v1116, %v1117
      %vm1119 = vcmask 122880
      %1120 = vst.msk [vmem:[%s314] sm:$0x1] %vm1119, %v1118
      %p1121 = scmp.lt.s32.totalorder %s20, 1
      %s1122 = scalar_select %p1121, %s20, 1
      %s1123 = smul.addr %s1122, 4
      %s1124 = smul.addr %s1123, 8
      %s1125 = scalar_lea.vmem %s7, %s1124
      %p1126 = scmp.lt.s32.totalorder %s20, 1
      %s1127 = scalar_select %p1126, %s20, 1
      %s1128 = scalar_lea.vmem %s8, %s1127
      // Predicated region
      $region49: #{encoder_block2.3} parent=47 // pred_check
        %p1129 = pneg %p190
      $region50: #{encoder_block2.3} parent=47 // pred_check_branch
        %1131 = sbr.rel (%p1129) target = $region52
      $region51: #{encoder_block2.3} parent=47 // pred_region
        _
      $region52: #{encoder_block2.3} parent=47 // pred_fallthru
        _
      // Predicated region
      $region53: #{encoder_block2.3} parent=47 // pred_check
        %p1132 = pneg %p216
      $region54: #{encoder_block2.3} parent=47 // pred_check_branch
        %1134 = sbr.rel (%p1132) target = $region56
      $region55: #{encoder_block2.3} parent=47 // pred_region
        _
      $region56: #{encoder_block2.3} parent=47 // pred_fallthru
        _
    $region48: #{encoder_block2.3} parent=5 // pred_fallthru
      _
    %p1135 = scmp.le.s32.totalorder 2, %s15
    // Predicated region
    $region57: #{encoder_block2.3} parent=5 // pred_check
      %p1136 = pneg %p1135
    $region58: #{encoder_block2.3} parent=5 // pred_check_branch
      %1138 = sbr.rel (%p1136) target = $region60
    $region59: #{encoder_block2.3} parent=5 // pred_region
      %s1139 = ssub.s32 %s15, 2
      // Predicated region
      $region61: #{encoder_block2.3} parent=59 // pred_check
        %p1140 = pneg %p196
      $region62: #{encoder_block2.3} parent=59 // pred_check_branch
        %1142 = sbr.rel (%p1140) target = $region64
      $region63: #{encoder_block2.3} parent=59 // pred_region
        %p1143 = scmp.lt.s32.totalorder %s21, 1
        %s1144 = scalar_select %p1143, %s21, 1
        %s1145 = smul.addr %s1144, 4
        %s1146 = smul.addr %s1145, 8
        %s1147 = scalar_lea.vmem %s7, %s1146
      $region64: #{encoder_block2.3} parent=59 // pred_fallthru
        _
      // Predicated region
      $region65: #{encoder_block2.3} parent=59 // pred_check
        %p1148 = pneg %p222
      $region66: #{encoder_block2.3} parent=59 // pred_check_branch
        %1150 = sbr.rel (%p1148) target = $region68
      $region67: #{encoder_block2.3} parent=59 // pred_region
        %p1151 = scmp.lt.s32.totalorder %s21, 1
        %s1152 = scalar_select %p1151, %s21, 1
        %s1153 = scalar_lea.vmem %s8, %s1152
      $region68: #{encoder_block2.3} parent=59 // pred_fallthru
        _
    $region60: #{encoder_block2.3} parent=5 // pred_fallthru
      _
  $region6: #{encoder_block2.3} parent=0 // loop_footer
    %s19 = sadd.s32 1, %s15
  $region7: #{encoder_block2.3} parent=0 // loop_footer_branch
    %14 = sbr.rel target = $region3
  $region8: #{encoder_block2.3} parent=0 // loop_exit
    _

// kernel: encoder_block2.4
$region0: #{encoder_block2.4}
  #allocation0 [shape = 'u32[]', space=smem, size = 0x4, offset = 0x4, fixed_abs, tag = 'smem constant byte address 0x4 - core index']
  #allocation1 [shape = 'u32[144,128]{1,0:T(1,128)}', space=vmem, size = 0x12000, scoped, tag = 'internal scratch']
  %s0 = inlined_call_operand.vmem [shape: f32[2,16,256], index: 0, kind: input, shape index: {}]
  %s1 = inlined_call_operand.vmem [shape: f32[2,32,16], index: 1, kind: input, shape index: {}]
  %s2 = inlined_call_operand.vmem [shape: f32[32,1], index: 2, kind: input, shape index: {}]
  %s3 = inlined_call_operand.vmem [shape: f32[32,1], index: 3, kind: input, shape index: {}]
  %s4 = inlined_call_operand.vmem [shape: f32[32,1], index: 4, kind: input, shape index: {}]
  %s5 = inlined_call_operand.vmem [shape: f32[32,1], index: 5, kind: input, shape index: {}]
  %s6 = inlined_call_operand.vmem [shape: f32[2,32,256], index: 6, kind: output, shape index: {0}]
  %s7 = inlined_call_operand.vmem [shape: f32[2,32,1], index: 7, kind: output, shape index: {1}]
  %8 = xla_tuple %s6, %s7
  %s9 = sld [smem:[#allocation0]]
  $region69: #{encoder_block2.4} parent=0
    _
  %s11 = ssub.s32 1, %s9
  %s12 = scalar_select 0, %s11, %s9
  loop: start=0, step=1, limit=4
  $region2: #{encoder_block2.4} parent=0 // loop_pre_header
    _
  $region3: #{encoder_block2.4} parent=0 // loop_header
    %s14 = sphi 0, %s18
    %p15 = scmp.ge.s32.totalorder %s14, 4
    %s21 = sphi 0, %s33
    %s22 = sphi 0, %s29
    %s23 = sphi 0, %s21
    %s24 = sphi 0, %s22
    %s25 = sphi 0, %s23
    %s26 = sphi 0, %s24
    %s38 = sphi 0, %s40
    %s41 = sphi 0, %s38
    %s42 = sphi 0, %s41
    %s58 = sphi 0, %s42
    %s64 = sphi 0, %s66
    %s67 = sphi 0, %s64
    %s68 = sphi 0, %s67
    %s84 = sphi 0, %s68
    %s88 = sphi 0, %s88
    %s90 = sphi 0, %s88
    %s91 = sphi 0, %s90
    %s105 = sphi 0, %s91
    %s109 = sphi 0, %s109
    %s111 = sphi 0, %s109
    %s112 = sphi 0, %s111
    %s126 = sphi 0, %s112
    %s130 = sphi 0, %s130
    %s132 = sphi 0, %s130
    %s133 = sphi 0, %s132
    %s147 = sphi 0, %s133
    %s151 = sphi 0, %s151
    %s153 = sphi 0, %s151
    %s154 = sphi 0, %s153
    %s168 = sphi 0, %s154
    %s176 = sphi 0, %s178
    %s179 = sphi 0, %s176
    %s180 = sphi 0, %s179
    %s196 = sphi 0, %s180
    %s202 = sphi 0, %s204
    %s205 = sphi 0, %s202
    %s206 = sphi 0, %s205
    %s222 = sphi 0, %s206
  $region4: #{encoder_block2.4} parent=0 // loop_header_branch
    %17 = sbr.rel (%p15) target = $region8
  $region5: #{encoder_block2.4} parent=0 // loop_body
    %s19 = ssub.s32 %s14, 1
    %s20 = ssub.s32 %s14, 2
    %s27 = sadd.s32 1, %s22
    %p28 = scmp.ge.s32.totalorder %s27, 1
    %s29 = scalar_select %p28, 0, %s27
    %s30 = sadd.s32 1, %s21
    %s31 = scalar_select %p28, %s30, %s21
    %p32 = scmp.ge.s32.totalorder %s31, 2
    %s33 = scalar_select %p32, 0, %s31
    %s34 = ssub.s32 %s21, %s33
    %s35 = ssub.s32 %s22, %s29
    %s36 = sor.u32 %s34, %s35
    %p37 = scmp.eq.s32.totalorder %s36, 0
    %s39 = sadd.s32 %s38, 1
    %s40 = scalar_select %p37, %s38, %s39
    %p43 = pneg %p37
    %p44 = scmp.eq.s32.totalorder %s14, 1
    %p45 = por %p43, %p44
    %p46 = scmp.ne.s32.totalorder %s38, %s41
    %p47 = scmp.eq.s32.totalorder %s14, 0
    %p48 = por %p46, %p47
    %p49 = scmp.ne.s32.totalorder %s38, %s41
    %p50 = scmp.eq.s32.totalorder %s19, 1
    %p51 = por %p49, %p50
    %p52 = scmp.ne.s32.totalorder %s41, %s42
    %p53 = scmp.eq.s32.totalorder %s19, 0
    %p54 = por %p52, %p53
    %p55 = scmp.ne.s32.totalorder %s41, %s42
    %p56 = scmp.eq.s32.totalorder %s20, 1
    %p57 = por %p55, %p56
    %p59 = scmp.ne.s32.totalorder %s42, %s58
    %p60 = scmp.eq.s32.totalorder %s20, 0
    %p61 = por %p59, %p60
    %s62 = ssub.s32 %s21, %s33
    %p63 = scmp.eq.s32.totalorder %s62, 0
    %s65 = sadd.s32 %s64, 1
    %s66 = scalar_select %p63, %s64, %s65
    %p69 = pneg %p63
    %p70 = scmp.eq.s32.totalorder %s14, 1
    %p71 = por %p69, %p70
    %p72 = scmp.ne.s32.totalorder %s64, %s67
    %p73 = scmp.eq.s32.totalorder %s14, 0
    %p74 = por %p72, %p73
    %p75 = scmp.ne.s32.totalorder %s64, %s67
    %p76 = scmp.eq.s32.totalorder %s19, 1
    %p77 = por %p75, %p76
    %p78 = scmp.ne.s32.totalorder %s67, %s68
    %p79 = scmp.eq.s32.totalorder %s19, 0
    %p80 = por %p78, %p79
    %p81 = scmp.ne.s32.totalorder %s67, %s68
    %p82 = scmp.eq.s32.totalorder %s20, 1
    %p83 = por %p81, %p82
    %p85 = scmp.ne.s32.totalorder %s68, %s84
    %p86 = scmp.eq.s32.totalorder %s20, 0
    %p87 = por %p85, %p86
    %s89 = sadd.s32 %s88, 1
    %p92 = scmp.eq.s32.totalorder %s14, 1
    %p93 = scmp.ne.s32.totalorder %s88, %s90
    %p94 = scmp.eq.s32.totalorder %s14, 0
    %p95 = por %p93, %p94
    %p96 = scmp.ne.s32.totalorder %s88, %s90
    %p97 = scmp.eq.s32.totalorder %s19, 1
    %p98 = por %p96, %p97
    %p99 = scmp.ne.s32.totalorder %s90, %s91
    %p100 = scmp.eq.s32.totalorder %s19, 0
    %p101 = por %p99, %p100
    %p102 = scmp.ne.s32.totalorder %s90, %s91
    %p103 = scmp.eq.s32.totalorder %s20, 1
    %p104 = por %p102, %p103
    %p106 = scmp.ne.s32.totalorder %s91, %s105
    %p107 = scmp.eq.s32.totalorder %s20, 0
    %p108 = por %p106, %p107
    %s110 = sadd.s32 %s109, 1
    %p113 = scmp.eq.s32.totalorder %s14, 1
    %p114 = scmp.ne.s32.totalorder %s109, %s111
    %p115 = scmp.eq.s32.totalorder %s14, 0
    %p116 = por %p114, %p115
    %p117 = scmp.ne.s32.totalorder %s109, %s111
    %p118 = scmp.eq.s32.totalorder %s19, 1
    %p119 = por %p117, %p118
    %p120 = scmp.ne.s32.totalorder %s111, %s112
    %p121 = scmp.eq.s32.totalorder %s19, 0
    %p122 = por %p120, %p121
    %p123 = scmp.ne.s32.totalorder %s111, %s112
    %p124 = scmp.eq.s32.totalorder %s20, 1
    %p125 = por %p123, %p124
    %p127 = scmp.ne.s32.totalorder %s112, %s126
    %p128 = scmp.eq.s32.totalorder %s20, 0
    %p129 = por %p127, %p128
    %s131 = sadd.s32 %s130, 1
    %p134 = scmp.eq.s32.totalorder %s14, 1
    %p135 = scmp.ne.s32.totalorder %s130, %s132
    %p136 = scmp.eq.s32.totalorder %s14, 0
    %p137 = por %p135, %p136
    %p138 = scmp.ne.s32.totalorder %s130, %s132
    %p139 = scmp.eq.s32.totalorder %s19, 1
    %p140 = por %p138, %p139
    %p141 = scmp.ne.s32.totalorder %s132, %s133
    %p142 = scmp.eq.s32.totalorder %s19, 0
    %p143 = por %p141, %p142
    %p144 = scmp.ne.s32.totalorder %s132, %s133
    %p145 = scmp.eq.s32.totalorder %s20, 1
    %p146 = por %p144, %p145
    %p148 = scmp.ne.s32.totalorder %s133, %s147
    %p149 = scmp.eq.s32.totalorder %s20, 0
    %p150 = por %p148, %p149
    %s152 = sadd.s32 %s151, 1
    %p155 = scmp.eq.s32.totalorder %s14, 1
    %p156 = scmp.ne.s32.totalorder %s151, %s153
    %p157 = scmp.eq.s32.totalorder %s14, 0
    %p158 = por %p156, %p157
    %p159 = scmp.ne.s32.totalorder %s151, %s153
    %p160 = scmp.eq.s32.totalorder %s19, 1
    %p161 = por %p159, %p160
    %p162 = scmp.ne.s32.totalorder %s153, %s154
    %p163 = scmp.eq.s32.totalorder %s19, 0
    %p164 = por %p162, %p163
    %p165 = scmp.ne.s32.totalorder %s153, %s154
    %p166 = scmp.eq.s32.totalorder %s20, 1
    %p167 = por %p165, %p166
    %p169 = scmp.ne.s32.totalorder %s154, %s168
    %p170 = scmp.eq.s32.totalorder %s20, 0
    %p171 = por %p169, %p170
    %s172 = ssub.s32 %s21, %s33
    %s173 = ssub.s32 %s22, %s29
    %s174 = sor.u32 %s172, %s173
    %p175 = scmp.eq.s32.totalorder %s174, 0
    %s177 = sadd.s32 %s176, 1
    %s178 = scalar_select %p175, %s176, %s177
    %p181 = pneg %p175
    %p182 = scmp.eq.s32.totalorder %s14, 1
    %p183 = por %p181, %p182
    %p184 = scmp.ne.s32.totalorder %s176, %s179
    %p185 = scmp.eq.s32.totalorder %s14, 0
    %p186 = por %p184, %p185
    %p187 = scmp.ne.s32.totalorder %s176, %s179
    %p188 = scmp.eq.s32.totalorder %s19, 1
    %p189 = por %p187, %p188
    %p190 = scmp.ne.s32.totalorder %s179, %s180
    %p191 = scmp.eq.s32.totalorder %s19, 0
    %p192 = por %p190, %p191
    %p193 = scmp.ne.s32.totalorder %s179, %s180
    %p194 = scmp.eq.s32.totalorder %s20, 1
    %p195 = por %p193, %p194
    %p197 = scmp.ne.s32.totalorder %s180, %s196
    %p198 = scmp.eq.s32.totalorder %s20, 0
    %p199 = por %p197, %p198
    %s200 = ssub.s32 %s21, %s33
    %p201 = scmp.eq.s32.totalorder %s200, 0
    %s203 = sadd.s32 %s202, 1
    %s204 = scalar_select %p201, %s202, %s203
    %p207 = pneg %p201
    %p208 = scmp.eq.s32.totalorder %s14, 1
    %p209 = por %p207, %p208
    %p210 = scmp.ne.s32.totalorder %s202, %s205
    %p211 = scmp.eq.s32.totalorder %s14, 0
    %p212 = por %p210, %p211
    %p213 = scmp.ne.s32.totalorder %s202, %s205
    %p214 = scmp.eq.s32.totalorder %s19, 1
    %p215 = por %p213, %p214
    %p216 = scmp.ne.s32.totalorder %s205, %s206
    %p217 = scmp.eq.s32.totalorder %s19, 0
    %p218 = por %p216, %p217
    %p219 = scmp.ne.s32.totalorder %s205, %s206
    %p220 = scmp.eq.s32.totalorder %s20, 1
    %p221 = por %p219, %p220
    %p223 = scmp.ne.s32.totalorder %s206, %s222
    %p224 = scmp.eq.s32.totalorder %s20, 0
    %p225 = por %p223, %p224
    %p226 = scmp.le.s32.totalorder 1, %s14
    %p227 = scmp.lt.s32.totalorder %s14, 3
    %p228 = pnand %p226, %p227
    %p229 = pneg %p228
    // Predicated region
    $region9: #{encoder_block2.4} parent=5 // pred_check
      _
    $region10: #{encoder_block2.4} parent=5 // pred_check_branch
      %231 = sbr.rel (%p228) target = $region12
    $region11: #{encoder_block2.4} parent=5 // pred_region
      %s232 = ssub.s32 %s14, 1
      // Predicated region
      $region13: #{encoder_block2.4} parent=11 // pred_check
        %p233 = pneg %p101
      $region14: #{encoder_block2.4} parent=11 // pred_check_branch
        %235 = sbr.rel (%p233) target = $region16
      $region15: #{encoder_block2.4} parent=11 // pred_region
        _
      $region16: #{encoder_block2.4} parent=11 // pred_fallthru
        _
      // Predicated region
      $region17: #{encoder_block2.4} parent=11 // pred_check
        %p236 = pneg %p122
      $region18: #{encoder_block2.4} parent=11 // pred_check_branch
        %238 = sbr.rel (%p236) target = $region20
      $region19: #{encoder_block2.4} parent=11 // pred_region
        _
      $region20: #{encoder_block2.4} parent=11 // pred_fallthru
        _
      // Predicated region
      $region21: #{encoder_block2.4} parent=11 // pred_check
        %p239 = pneg %p143
      $region22: #{encoder_block2.4} parent=11 // pred_check_branch
        %241 = sbr.rel (%p239) target = $region24
      $region23: #{encoder_block2.4} parent=11 // pred_region
        _
      $region24: #{encoder_block2.4} parent=11 // pred_fallthru
        _
      // Predicated region
      $region25: #{encoder_block2.4} parent=11 // pred_check
        %p242 = pneg %p164
      $region26: #{encoder_block2.4} parent=11 // pred_check_branch
        %244 = sbr.rel (%p242) target = $region28
      $region27: #{encoder_block2.4} parent=11 // pred_region
        _
      $region28: #{encoder_block2.4} parent=11 // pred_fallthru
        _
    $region12: #{encoder_block2.4} parent=5 // pred_fallthru
      _
    %p245 = scmp.lt.s32.totalorder %s14, 2
    // Predicated region
    $region29: #{encoder_block2.4} parent=5 // pred_check
      %p246 = pneg %p245
    $region30: #{encoder_block2.4} parent=5 // pred_check_branch
      %248 = sbr.rel (%p246) target = $region32
    $region31: #{encoder_block2.4} parent=5 // pred_region
      // Predicated region
      $region33: #{encoder_block2.4} parent=31 // pred_check
        %p249 = pneg %p48
      $region34: #{encoder_block2.4} parent=31 // pred_check_branch
        %251 = sbr.rel (%p249) target = $region36
      $region35: #{encoder_block2.4} parent=31 // pred_region
        %s252 = smul.u32 2, %s22
        %p253 = scmp.lt.s32.totalorder %s21, 1
        %s254 = scalar_select %p253, %s21, 1
        %p255 = scmp.lt.s32.totalorder %s252, 1
        %s256 = scalar_select %p255, %s252, 1
        %s257 = smul.addr %s254, 4
        %s258 = sadd.s32 %s256, %s257
        %s259 = smul.addr %s258, 8
        %s260 = scalar_lea.vmem %s0, %s259
        %s261 = smul.u32 2, %s22
      $region36: #{encoder_block2.4} parent=31 // pred_fallthru
        _
      // Predicated region
      $region37: #{encoder_block2.4} parent=31 // pred_check
        %p262 = pneg %p74
      $region38: #{encoder_block2.4} parent=31 // pred_check_branch
        %264 = sbr.rel (%p262) target = $region40
      $region39: #{encoder_block2.4} parent=31 // pred_region
        %p265 = scmp.lt.s32.totalorder %s21, 1
        %s266 = scalar_select %p265, %s21, 1
        %s267 = smul.addr %s266, 4
        %s268 = smul.addr %s267, 8
        %s269 = scalar_lea.vmem %s1, %s268
      $region40: #{encoder_block2.4} parent=31 // pred_fallthru
        _
    $region32: #{encoder_block2.4} parent=5 // pred_fallthru
      _
    %p270 = scmp.le.s32.totalorder 1, %s14
    %p271 = scmp.lt.s32.totalorder %s14, 3
    %p272 = pnand %p270, %p271
    %p273 = pneg %p272
    // Predicated region
    $region41: #{encoder_block2.4} parent=5 // pred_check
      _
    $region42: #{encoder_block2.4} parent=5 // pred_check_branch
      %275 = sbr.rel (%p272) target = $region44
    $region43: #{encoder_block2.4} parent=5 // pred_region
      %s276 = ssub.s32 %s14, 1
      %s277 = smul.u32 2, %s24
      %p278 = scmp.lt.s32.totalorder %s23, 1
      %s279 = scalar_select %p278, %s23, 1
      %p280 = scmp.lt.s32.totalorder %s277, 1
      %s281 = scalar_select %p280, %s277, 1
      %s282 = smul.addr %s279, 4
      %s283 = sadd.s32 %s281, %s282
      %s284 = smul.addr %s283, 8
      %s285 = scalar_lea.vmem %s0, %s284
      %p286 = pneg %p54
      %p287 = pneg %p51
      %p288 = scmp.lt.s32.totalorder %s23, 1
      %s289 = scalar_select %p288, %s23, 1
      %s290 = smul.addr %s289, 4
      %s291 = smul.addr %s290, 8
      %s292 = scalar_lea.vmem %s1, %s291
      %p293 = pneg %p80
      %p294 = pneg %p77
      %p295 = pneg %p101
      %p296 = pneg %p98
      %p297 = pneg %p122
      %p298 = pneg %p119
      %p299 = pneg %p143
      %p300 = pneg %p140
      %p301 = pneg %p164
      %p302 = pneg %p161
      %p303 = pneg %p192
      %p304 = pneg %p189
      %s305 = smul.u32 2, %s24
      %p306 = scmp.lt.s32.totalorder %s23, 1
      %s307 = scalar_select %p306, %s23, 1
      %p308 = scmp.lt.s32.totalorder %s305, 1
      %s309 = scalar_select %p308, %s305, 1
      %s310 = smul.addr %s307, 8
      %s311 = sadd.s32 %s309, %s310
      %s312 = smul.addr %s311, 8
      %s313 = scalar_lea.vmem %s6, %s312
      %p314 = pneg %p218
      %p315 = pneg %p215
      %p316 = scmp.lt.s32.totalorder %s23, 1
      %s317 = scalar_select %p316, %s23, 1
      %s318 = smul.addr %s317, 4
      %s319 = smul.addr %s318, 8
      %s320 = scalar_lea.vmem %s7, %s319
      %s321 = smul.u32 2, %s24
      %p322 = scmp.lt.s32.totalorder %s23, 1
      %s323 = scalar_select %p322, %s23, 1
      %p324 = scmp.lt.s32.totalorder %s321, 1
      %s325 = scalar_select %p324, %s321, 1
      %s326 = smul.addr %s323, 4
      %s327 = sadd.s32 %s325, %s326
      %s328 = smul.addr %s327, 8
      %s329 = scalar_lea.vmem %s0, %s328
      %s330 = smul.u32 2, %s24
      %p331 = scmp.lt.s32.totalorder %s23, 1
      %s332 = scalar_select %p331, %s23, 1
      %s333 = smul.addr %s332, 4
      %s334 = smul.addr %s333, 8
      %s335 = scalar_lea.vmem %s1, %s334
      %s336 = smul.u32 2, %s24
      %p337 = scmp.lt.s32.totalorder %s23, 1
      %s338 = scalar_select %p337, %s23, 1
      %p339 = scmp.lt.s32.totalorder %s336, 1
      %s340 = scalar_select %p339, %s336, 1
      %s341 = smul.addr %s338, 8
      %s342 = sadd.s32 %s340, %s341
      %s343 = smul.addr %s342, 8
      %s344 = scalar_lea.vmem %s6, %s343
      %s345 = smul.u32 2, %s24
      %p346 = scmp.lt.s32.totalorder %s23, 1
      %s347 = scalar_select %p346, %s23, 1
      %s348 = smul.addr %s347, 4
      %s349 = smul.addr %s348, 8
      %s350 = scalar_lea.vmem %s7, %s349
      %p351 = scmp.eq.s32.totalorder %s24, 0
      // Predicated region
      $region45: #{encoder_block2.4} parent=43 // pred_check
        %p352 = pneg %p351
      $region46: #{encoder_block2.4} parent=43 // pred_check_branch
        %354 = sbr.rel (%p352) target = $region48
      $region47: #{encoder_block2.4} parent=43 // pred_region
        %vm355 = vcmask 7168
        %356 = vst.msk [vmem:[%s350] sm:$0xff] %vm355, 0.0
        %357 = vst.msk [vmem:[%s350 + $0x8] sm:$0xff] %vm355, 0.0
        %358 = vst.msk [vmem:[%s350 + $0x10] sm:$0xff] %vm355, 0.0
        %359 = vst.msk [vmem:[%s350 + $0x18] sm:$0xff] %vm355, 0.0
      $region48: #{encoder_block2.4} parent=43 // pred_fallthru
        _
      %v360 = vld [vmem:[%s335] sm:$0xff]
      %v361 = vld [vmem:[%s335 + $0x8] sm:$0xff]
      %v362 = vld [vmem:[%s335 + $0x10] sm:$0xff]
      %v363 = vld [vmem:[%s335 + $0x18] sm:$0xff]
      %v364 = vld [vmem:[%s329] sm:$0xff]
      %v365 = vld [vmem:[%s329 + $0x8] sm:$0xff]
      %v366 = vld [vmem:[%s329 + $0x10] sm:$0xff]
      %v367 = vld [vmem:[%s329 + $0x18] sm:$0xff]
      %v368 = vld [vmem:[%s2] sm:$0xff]
      %v369 = vld [vmem:[%s2 + $0x8] sm:$0xff]
      %v370 = vld [vmem:[%s2 + $0x10] sm:$0xff]
      %v371 = vld [vmem:[%s2 + $0x18] sm:$0xff]
      %373 = vset.pattern.permute.xlu0 0
      %374 = vperm.xlu0 %373, %v368
      %v375 = vpop.permute.xlu0 %374
      %378 = vset.pattern.permute.xlu0 0
      %379 = vperm.xlu0 %378, %v369
      %v380 = vpop.permute.xlu0 %379
      %383 = vset.pattern.permute.xlu0 0
      %384 = vperm.xlu0 %383, %v370
      %v385 = vpop.permute.xlu0 %384
      %388 = vset.pattern.permute.xlu0 0
      %389 = vperm.xlu0 %388, %v371
      %v390 = vpop.permute.xlu0 %389
      %vm392 = vcmask 130048
      %v394 = vsel %vm392, %v360, 0
      %v397 = vsel %vm392, %v361, 0
      %v400 = vsel %vm392, %v362, 0
      %v403 = vsel %vm392, %v363, 0
      %405 = vmatprep.subr.mxu0 0.0
      %406 = vmatpush1.msra.mxu0 0.0
      %407 = vmatprep.subr.mxu0 0.0
      %408 = vmatpush1.msra.mxu0 0.0
      %409 = vmatprep.subr.mxu0 0.0
      %410 = vmatpush1.msra.mxu0 0.0
      %411 = vmatprep.subr.mxu0 0.0
      %412 = vmatpush1.msra.mxu0 0.0
      %413 = vmatprep.subr.mxu0 0.0
      %414 = vmatpush1.msra.mxu0 0.0
      %415 = vmatprep.subr.mxu0 0.0
      %416 = vmatpush1.msra.mxu0 0.0
      %417 = vmatprep.subr.mxu0 0.0
      %418 = vmatpush1.msra.mxu0 0.0
      %419 = vmatprep.subr.mxu0 0.0
      %420 = vmatpush1.msra.mxu0 0.0
      %421 = vmatprep.subr.mxu0 0.0
      %422 = vmatpush1.msra.mxu0 0.0
      %423 = vmatprep.subr.mxu0 0.0
      %424 = vmatpush1.msra.mxu0 0.0
      %425 = vmatprep.subr.mxu0 0.0
      %426 = vmatpush1.msra.mxu0 0.0
      %427 = vmatprep.subr.mxu0 0.0
      %428 = vmatpush1.msra.mxu0 0.0
      %429 = vmatprep.subr.mxu0 0.0
      %430 = vmatpush1.msra.mxu0 0.0
      %431 = vmatprep.subr.mxu0 0.0
      %432 = vmatpush1.msra.mxu0 0.0
      %433 = vmatprep.subr.mxu0 %v367
      %434 = vmatpush1.msra.mxu0 %v366
      %435 = vmatprep.subr.mxu0 %v365
      %436 = vmatpush1.msra.mxu0 %v364
      %437 = vmatprep.subr.mxu0 0.0
      %438 = vmatpush2.msra.mxu0 0.0
      %439 = vmatprep.subr.mxu0 0.0
      %440 = vmatpush2.msra.mxu0 0.0
      %441 = vmatprep.subr.mxu0 0.0
      %442 = vmatpush2.msra.mxu0 0.0
      %443 = vmatprep.subr.mxu0 0.0
      %444 = vmatpush2.msra.mxu0 0.0
      %445 = vmatprep.subr.mxu0 0.0
      %446 = vmatpush2.msra.mxu0 0.0
      %447 = vmatprep.subr.mxu0 0.0
      %448 = vmatpush2.msra.mxu0 0.0
      %449 = vmatprep.subr.mxu0 0.0
      %450 = vmatpush2.msra.mxu0 0.0
      %451 = vmatprep.subr.mxu0 0.0
      %452 = vmatpush2.msra.mxu0 0.0
      %453 = vmatprep.subr.mxu0 0.0
      %454 = vmatpush2.msra.mxu0 0.0
      %455 = vmatprep.subr.mxu0 0.0
      %456 = vmatpush2.msra.mxu0 0.0
      %457 = vmatprep.subr.mxu0 0.0
      %458 = vmatpush2.msra.mxu0 0.0
      %459 = vmatprep.subr.mxu0 0.0
      %460 = vmatpush2.msra.mxu0 0.0
      %461 = vmatprep.subr.mxu0 0.0
      %462 = vmatpush2.msra.mxu0 0.0
      %463 = vmatprep.subr.mxu0 0.0
      %464 = vmatpush2.msra.mxu0 0.0
      %465 = vmatprep.subr.mxu0 0.0
      %466 = vmatpush2.msra.mxu0 0.0
      %467 = vmatprep.subr.mxu0 0.0
      %468 = vmatpush2.msra.mxu0 0.0
      %469 = vmatprep.mubr.f32.mxu0 0.0
      %470 = vmatmul.mubr.f32.gmra.mxu0 %v394
      %v471 = vpop.f32.mrf.mxu0
      %v472 = vadd.f32 %v375, %v471
      %v473 = vpop.f32.mrf.mxu0
      %v474 = vadd.f32 %v375, %v473
      %475 = vmatprep.mubr.f32.mxu0 0.0
      %476 = vmatmul.mubr.f32.gmra.mxu0 %v397
      %v477 = vpop.f32.mrf.mxu0
      %v478 = vadd.f32 %v380, %v477
      %v479 = vpop.f32.mrf.mxu0
      %v480 = vadd.f32 %v380, %v479
      %481 = vmatprep.mubr.f32.mxu0 0.0
      %482 = vmatmul.mubr.f32.gmra.mxu0 %v400
      %v483 = vpop.f32.mrf.mxu0
      %v484 = vadd.f32 %v385, %v483
      %v485 = vpop.f32.mrf.mxu0
      %v486 = vadd.f32 %v385, %v485
      %487 = vmatprep.mubr.f32.mxu0 0.0
      %488 = vmatmul.mubr.f32.gmra.mxu0 %v403
      %v489 = vpop.f32.mrf.mxu0
      %v490 = vadd.f32 %v390, %v489
      %v491 = vpop.f32.mrf.mxu0
      %v492 = vadd.f32 %v390, %v491
      %493 = vdwg.mxu0
      %v494 = vld [vmem:[%s3] sm:$0xff]
      %v495 = vld [vmem:[%s3 + $0x8] sm:$0xff]
      %v496 = vld [vmem:[%s3 + $0x10] sm:$0xff]
      %v497 = vld [vmem:[%s3 + $0x18] sm:$0xff]
      %499 = vset.pattern.permute.xlu0 0
      %500 = vperm.xlu0 %499, %v494
      %v501 = vpop.permute.xlu0 %500
      %504 = vset.pattern.permute.xlu0 0
      %505 = vperm.xlu0 %504, %v495
      %v506 = vpop.permute.xlu0 %505
      %509 = vset.pattern.permute.xlu0 0
      %510 = vperm.xlu0 %509, %v496
      %v511 = vpop.permute.xlu0 %510
      %514 = vset.pattern.permute.xlu0 0
      %515 = vperm.xlu0 %514, %v497
      %v516 = vpop.permute.xlu0 %515
      %v518 = vmul.f32 %v472, %v501
      %v519 = vmul.f32 %v474, %v501
      %v520 = vmul.f32 %v478, %v506
      %v521 = vmul.f32 %v480, %v506
      %v522 = vmul.f32 %v484, %v511
      %v523 = vmul.f32 %v486, %v511
      %v524 = vmul.f32 %v490, %v516
      %v525 = vmul.f32 %v492, %v516
      %v526 = vld [vmem:[%s4] sm:$0xff]
      %v527 = vld [vmem:[%s4 + $0x8] sm:$0xff]
      %v528 = vld [vmem:[%s4 + $0x10] sm:$0xff]
      %v529 = vld [vmem:[%s4 + $0x18] sm:$0xff]
      %531 = vset.pattern.permute.xlu0 0
      %532 = vperm.xlu0 %531, %v526
      %v533 = vpop.permute.xlu0 %532
      %536 = vset.pattern.permute.xlu0 0
      %537 = vperm.xlu0 %536, %v527
      %v538 = vpop.permute.xlu0 %537
      %541 = vset.pattern.permute.xlu0 0
      %542 = vperm.xlu0 %541, %v528
      %v543 = vpop.permute.xlu0 %542
      %546 = vset.pattern.permute.xlu0 0
      %547 = vperm.xlu0 %546, %v529
      %v548 = vpop.permute.xlu0 %547
      %v550 = vadd.f32 %v518, %v533
      %v551 = vadd.f32 %v519, %v533
      %v552 = vadd.f32 %v520, %v538
      %v553 = vadd.f32 %v521, %v538
      %v554 = vadd.f32 %v522, %v543
      %v555 = vadd.f32 %v523, %v543
      %v556 = vadd.f32 %v524, %v548
      %v557 = vadd.f32 %v525, %v548
      %vm558 = vcmp.ge.f32.partialorder %v550, 0.0
      %vm559 = vcmp.ge.f32.partialorder %v551, 0.0
      %vm560 = vcmp.ge.f32.partialorder %v552, 0.0
      %vm561 = vcmp.ge.f32.partialorder %v553, 0.0
      %vm562 = vcmp.ge.f32.partialorder %v554, 0.0
      %vm563 = vcmp.ge.f32.partialorder %v555, 0.0
      %vm564 = vcmp.ge.f32.partialorder %v556, 0.0
      %vm565 = vcmp.ge.f32.partialorder %v557, 0.0
      %v566 = vld [vmem:[%s5] sm:$0xff]
      %v567 = vld [vmem:[%s5 + $0x8] sm:$0xff]
      %v568 = vld [vmem:[%s5 + $0x10] sm:$0xff]
      %v569 = vld [vmem:[%s5 + $0x18] sm:$0xff]
      %571 = vset.pattern.permute.xlu0 0
      %572 = vperm.xlu0 %571, %v566
      %v573 = vpop.permute.xlu0 %572
      %576 = vset.pattern.permute.xlu0 0
      %577 = vperm.xlu0 %576, %v567
      %v578 = vpop.permute.xlu0 %577
      %581 = vset.pattern.permute.xlu0 0
      %582 = vperm.xlu0 %581, %v568
      %v583 = vpop.permute.xlu0 %582
      %586 = vset.pattern.permute.xlu0 0
      %587 = vperm.xlu0 %586, %v569
      %v588 = vpop.permute.xlu0 %587
      %v590 = vmul.f32 %v573, %v550
      %v591 = vmul.f32 %v573, %v551
      %v592 = vmul.f32 %v578, %v552
      %v593 = vmul.f32 %v578, %v553
      %v594 = vmul.f32 %v583, %v554
      %v595 = vmul.f32 %v583, %v555
      %v596 = vmul.f32 %v588, %v556
      %v597 = vmul.f32 %v588, %v557
      %v598 = vsel %vm558, %v550, %v590
      %v599 = vsel %vm559, %v551, %v591
      %v600 = vsel %vm560, %v552, %v592
      %v601 = vsel %vm561, %v553, %v593
      %v602 = vsel %vm562, %v554, %v594
      %v603 = vsel %vm563, %v555, %v595
      %v604 = vsel %vm564, %v556, %v596
      %v605 = vsel %vm565, %v557, %v597
      %606 = vst [vmem:[%s344] sm:$0xff] %v598
      %607 = vst [vmem:[%s344 + $0x8] sm:$0xff] %v599
      %608 = vst [vmem:[%s344 + $0x10] sm:$0xff] %v600
      %609 = vst [vmem:[%s344 + $0x18] sm:$0xff] %v601
      %610 = vst [vmem:[%s344 + $0x20] sm:$0xff] %v602
      %611 = vst [vmem:[%s344 + $0x28] sm:$0xff] %v603
      %612 = vst [vmem:[%s344 + $0x30] sm:$0xff] %v604
      %613 = vst [vmem:[%s344 + $0x38] sm:$0xff] %v605
      %v614 = vld [vmem:[%s350] sm:$0xff]
      %v615 = vld [vmem:[%s350 + $0x8] sm:$0xff]
      %v616 = vld [vmem:[%s350 + $0x10] sm:$0xff]
      %v617 = vld [vmem:[%s350 + $0x18] sm:$0xff]
      %v618 = vadd.f32 %v598, %v599
      %619 = vadd.xlane.f32.xlu0 %v618
      %v620 = vpop.xlane.xlu0 %619
      %v621 = vadd.f32 %v600, %v601
      %622 = vadd.xlane.f32.xlu0 %v621
      %v623 = vpop.xlane.xlu0 %622
      %v624 = vadd.f32 %v602, %v603
      %625 = vadd.xlane.f32.xlu0 %v624
      %v626 = vpop.xlane.xlu0 %625
      %v627 = vadd.f32 %v604, %v605
      %628 = vadd.xlane.f32.xlu0 %v627
      %v629 = vpop.xlane.xlu0 %628
      %v630 = vadd.f32 %v614, %v620
      %v631 = vadd.f32 %v615, %v623
      %v632 = vadd.f32 %v616, %v626
      %v633 = vadd.f32 %v617, %v629
      %vm634 = vcmask 7168
      %635 = vst.msk [vmem:[%s350] sm:$0xff] %vm634, %v630
      %636 = vst.msk [vmem:[%s350 + $0x8] sm:$0xff] %vm634, %v631
      %637 = vst.msk [vmem:[%s350 + $0x10] sm:$0xff] %vm634, %v632
      %638 = vst.msk [vmem:[%s350 + $0x18] sm:$0xff] %vm634, %v633
      %s639 = smul.u32 2, %s24
      %p640 = scmp.lt.s32.totalorder %s23, 1
      %s641 = scalar_select %p640, %s23, 1
      %p642 = scmp.lt.s32.totalorder %s639, 1
      %s643 = scalar_select %p642, %s639, 1
      %s644 = smul.addr %s641, 8
      %s645 = sadd.s32 %s643, %s644
      %s646 = smul.addr %s645, 8
      %s647 = scalar_lea.vmem %s6, %s646
      %p648 = scmp.lt.s32.totalorder %s23, 1
      %s649 = scalar_select %p648, %s23, 1
      %s650 = smul.addr %s649, 4
      %s651 = smul.addr %s650, 8
      %s652 = scalar_lea.vmem %s7, %s651
      // Predicated region
      $region49: #{encoder_block2.4} parent=43 // pred_check
        %p653 = pneg %p189
      $region50: #{encoder_block2.4} parent=43 // pred_check_branch
        %655 = sbr.rel (%p653) target = $region52
      $region51: #{encoder_block2.4} parent=43 // pred_region
        %s656 = smul.u32 2, %s24
      $region52: #{encoder_block2.4} parent=43 // pred_fallthru
        _
      // Predicated region
      $region53: #{encoder_block2.4} parent=43 // pred_check
        %p657 = pneg %p215
      $region54: #{encoder_block2.4} parent=43 // pred_check_branch
        %659 = sbr.rel (%p657) target = $region56
      $region55: #{encoder_block2.4} parent=43 // pred_region
        _
      $region56: #{encoder_block2.4} parent=43 // pred_fallthru
        _
    $region44: #{encoder_block2.4} parent=5 // pred_fallthru
      _
    %p660 = scmp.le.s32.totalorder 2, %s14
    // Predicated region
    $region57: #{encoder_block2.4} parent=5 // pred_check
      %p661 = pneg %p660
    $region58: #{encoder_block2.4} parent=5 // pred_check_branch
      %663 = sbr.rel (%p661) target = $region60
    $region59: #{encoder_block2.4} parent=5 // pred_region
      %s664 = ssub.s32 %s14, 2
      // Predicated region
      $region61: #{encoder_block2.4} parent=59 // pred_check
        %p665 = pneg %p195
      $region62: #{encoder_block2.4} parent=59 // pred_check_branch
        %667 = sbr.rel (%p665) target = $region64
      $region63: #{encoder_block2.4} parent=59 // pred_region
        %s668 = smul.u32 2, %s26
        %p669 = scmp.lt.s32.totalorder %s25, 1
        %s670 = scalar_select %p669, %s25, 1
        %p671 = scmp.lt.s32.totalorder %s668, 1
        %s672 = scalar_select %p671, %s668, 1
        %s673 = smul.addr %s670, 8
        %s674 = sadd.s32 %s672, %s673
        %s675 = smul.addr %s674, 8
        %s676 = scalar_lea.vmem %s6, %s675
      $region64: #{encoder_block2.4} parent=59 // pred_fallthru
        _
      // Predicated region
      $region65: #{encoder_block2.4} parent=59 // pred_check
        %p677 = pneg %p221
      $region66: #{encoder_block2.4} parent=59 // pred_check_branch
        %679 = sbr.rel (%p677) target = $region68
      $region67: #{encoder_block2.4} parent=59 // pred_region
        %p680 = scmp.lt.s32.totalorder %s25, 1
        %s681 = scalar_select %p680, %s25, 1
        %s682 = smul.addr %s681, 4
        %s683 = smul.addr %s682, 8
        %s684 = scalar_lea.vmem %s7, %s683
      $region68: #{encoder_block2.4} parent=59 // pred_fallthru
        _
    $region60: #{encoder_block2.4} parent=5 // pred_fallthru
      _
  $region6: #{encoder_block2.4} parent=0 // loop_footer
    %s18 = sadd.s32 1, %s14
  $region7: #{encoder_block2.4} parent=0 // loop_footer_branch
    %13 = sbr.rel target = $region3
  $region8: #{encoder_block2.4} parent=0 // loop_exit
    _

// kernel: encoder_block2.5
$region0: #{encoder_block2.5}
  #allocation0 [shape = 'u32[]', space=smem, size = 0x4, offset = 0x4, fixed_abs, tag = 'smem constant byte address 0x4 - core index']
  #allocation1 [shape = 'u32[144,128]{1,0:T(1,128)}', space=vmem, size = 0x12000, scoped, tag = 'internal scratch']
  %s0 = inlined_call_operand.vmem [shape: f32[2,32,256], index: 0, kind: input, shape index: {}]
  %s1 = inlined_call_operand.vmem [shape: f32[2,32,1], index: 1, kind: input, shape index: {}]
  %s2 = inlined_call_operand.vmem [shape: f32[32,1], index: 2, kind: input, shape index: {}]
  %s3 = inlined_call_operand.vmem [shape: f32[2,32,256], index: 3, kind: output, shape index: {}]
  %s4 = sld [smem:[#allocation0]]
  $region45: #{encoder_block2.5} parent=0
    _
  %s6 = ssub.s32 1, %s4
  %s7 = scalar_select 0, %s6, %s4
  loop: start=0, step=1, limit=4
  $region2: #{encoder_block2.5} parent=0 // loop_pre_header
    _
  $region3: #{encoder_block2.5} parent=0 // loop_header
    %s9 = sphi 0, %s13
    %p10 = scmp.ge.s32.totalorder %s9, 4
    %s16 = sphi 0, %s28
    %s17 = sphi 0, %s24
    %s18 = sphi 0, %s16
    %s19 = sphi 0, %s17
    %s20 = sphi 0, %s18
    %s21 = sphi 0, %s19
    %s33 = sphi 0, %s35
    %s36 = sphi 0, %s33
    %s37 = sphi 0, %s36
    %s53 = sphi 0, %s37
    %s59 = sphi 0, %s61
    %s62 = sphi 0, %s59
    %s63 = sphi 0, %s62
    %s79 = sphi 0, %s63
    %s83 = sphi 0, %s83
    %s85 = sphi 0, %s83
    %s86 = sphi 0, %s85
    %s100 = sphi 0, %s86
    %s108 = sphi 0, %s110
    %s111 = sphi 0, %s108
    %s112 = sphi 0, %s111
    %s128 = sphi 0, %s112
  $region4: #{encoder_block2.5} parent=0 // loop_header_branch
    %12 = sbr.rel (%p10) target = $region8
  $region5: #{encoder_block2.5} parent=0 // loop_body
    %s14 = ssub.s32 %s9, 1
    %s15 = ssub.s32 %s9, 2
    %s22 = sadd.s32 1, %s17
    %p23 = scmp.ge.s32.totalorder %s22, 1
    %s24 = scalar_select %p23, 0, %s22
    %s25 = sadd.s32 1, %s16
    %s26 = scalar_select %p23, %s25, %s16
    %p27 = scmp.ge.s32.totalorder %s26, 2
    %s28 = scalar_select %p27, 0, %s26
    %s29 = ssub.s32 %s16, %s28
    %s30 = ssub.s32 %s17, %s24
    %s31 = sor.u32 %s29, %s30
    %p32 = scmp.eq.s32.totalorder %s31, 0
    %s34 = sadd.s32 %s33, 1
    %s35 = scalar_select %p32, %s33, %s34
    %p38 = pneg %p32
    %p39 = scmp.eq.s32.totalorder %s9, 1
    %p40 = por %p38, %p39
    %p41 = scmp.ne.s32.totalorder %s33, %s36
    %p42 = scmp.eq.s32.totalorder %s9, 0
    %p43 = por %p41, %p42
    %p44 = scmp.ne.s32.totalorder %s33, %s36
    %p45 = scmp.eq.s32.totalorder %s14, 1
    %p46 = por %p44, %p45
    %p47 = scmp.ne.s32.totalorder %s36, %s37
    %p48 = scmp.eq.s32.totalorder %s14, 0
    %p49 = por %p47, %p48
    %p50 = scmp.ne.s32.totalorder %s36, %s37
    %p51 = scmp.eq.s32.totalorder %s15, 1
    %p52 = por %p50, %p51
    %p54 = scmp.ne.s32.totalorder %s37, %s53
    %p55 = scmp.eq.s32.totalorder %s15, 0
    %p56 = por %p54, %p55
    %s57 = ssub.s32 %s16, %s28
    %p58 = scmp.eq.s32.totalorder %s57, 0
    %s60 = sadd.s32 %s59, 1
    %s61 = scalar_select %p58, %s59, %s60
    %p64 = pneg %p58
    %p65 = scmp.eq.s32.totalorder %s9, 1
    %p66 = por %p64, %p65
    %p67 = scmp.ne.s32.totalorder %s59, %s62
    %p68 = scmp.eq.s32.totalorder %s9, 0
    %p69 = por %p67, %p68
    %p70 = scmp.ne.s32.totalorder %s59, %s62
    %p71 = scmp.eq.s32.totalorder %s14, 1
    %p72 = por %p70, %p71
    %p73 = scmp.ne.s32.totalorder %s62, %s63
    %p74 = scmp.eq.s32.totalorder %s14, 0
    %p75 = por %p73, %p74
    %p76 = scmp.ne.s32.totalorder %s62, %s63
    %p77 = scmp.eq.s32.totalorder %s15, 1
    %p78 = por %p76, %p77
    %p80 = scmp.ne.s32.totalorder %s63, %s79
    %p81 = scmp.eq.s32.totalorder %s15, 0
    %p82 = por %p80, %p81
    %s84 = sadd.s32 %s83, 1
    %p87 = scmp.eq.s32.totalorder %s9, 1
    %p88 = scmp.ne.s32.totalorder %s83, %s85
    %p89 = scmp.eq.s32.totalorder %s9, 0
    %p90 = por %p88, %p89
    %p91 = scmp.ne.s32.totalorder %s83, %s85
    %p92 = scmp.eq.s32.totalorder %s14, 1
    %p93 = por %p91, %p92
    %p94 = scmp.ne.s32.totalorder %s85, %s86
    %p95 = scmp.eq.s32.totalorder %s14, 0
    %p96 = por %p94, %p95
    %p97 = scmp.ne.s32.totalorder %s85, %s86
    %p98 = scmp.eq.s32.totalorder %s15, 1
    %p99 = por %p97, %p98
    %p101 = scmp.ne.s32.totalorder %s86, %s100
    %p102 = scmp.eq.s32.totalorder %s15, 0
    %p103 = por %p101, %p102
    %s104 = ssub.s32 %s16, %s28
    %s105 = ssub.s32 %s17, %s24
    %s106 = sor.u32 %s104, %s105
    %p107 = scmp.eq.s32.totalorder %s106, 0
    %s109 = sadd.s32 %s108, 1
    %s110 = scalar_select %p107, %s108, %s109
    %p113 = pneg %p107
    %p114 = scmp.eq.s32.totalorder %s9, 1
    %p115 = por %p113, %p114
    %p116 = scmp.ne.s32.totalorder %s108, %s111
    %p117 = scmp.eq.s32.totalorder %s9, 0
    %p118 = por %p116, %p117
    %p119 = scmp.ne.s32.totalorder %s108, %s111
    %p120 = scmp.eq.s32.totalorder %s14, 1
    %p121 = por %p119, %p120
    %p122 = scmp.ne.s32.totalorder %s111, %s112
    %p123 = scmp.eq.s32.totalorder %s14, 0
    %p124 = por %p122, %p123
    %p125 = scmp.ne.s32.totalorder %s111, %s112
    %p126 = scmp.eq.s32.totalorder %s15, 1
    %p127 = por %p125, %p126
    %p129 = scmp.ne.s32.totalorder %s112, %s128
    %p130 = scmp.eq.s32.totalorder %s15, 0
    %p131 = por %p129, %p130
    %p132 = scmp.le.s32.totalorder 1, %s9
    %p133 = scmp.lt.s32.totalorder %s9, 3
    %p134 = pnand %p132, %p133
    %p135 = pneg %p134
    // Predicated region
    $region9: #{encoder_block2.5} parent=5 // pred_check
      _
    $region10: #{encoder_block2.5} parent=5 // pred_check_branch
      %137 = sbr.rel (%p134) target = $region12
    $region11: #{encoder_block2.5} parent=5 // pred_region
      %s138 = ssub.s32 %s9, 1
      // Predicated region
      $region13: #{encoder_block2.5} parent=11 // pred_check
        %p139 = pneg %p96
      $region14: #{encoder_block2.5} parent=11 // pred_check_branch
        %141 = sbr.rel (%p139) target = $region16
      $region15: #{encoder_block2.5} parent=11 // pred_region
        _
      $region16: #{encoder_block2.5} parent=11 // pred_fallthru
        _
    $region12: #{encoder_block2.5} parent=5 // pred_fallthru
      _
    %p142 = scmp.lt.s32.totalorder %s9, 2
    // Predicated region
    $region17: #{encoder_block2.5} parent=5 // pred_check
      %p143 = pneg %p142
    $region18: #{encoder_block2.5} parent=5 // pred_check_branch
      %145 = sbr.rel (%p143) target = $region20
    $region19: #{encoder_block2.5} parent=5 // pred_region
      // Predicated region
      $region21: #{encoder_block2.5} parent=19 // pred_check
        %p146 = pneg %p43
      $region22: #{encoder_block2.5} parent=19 // pred_check_branch
        %148 = sbr.rel (%p146) target = $region24
      $region23: #{encoder_block2.5} parent=19 // pred_region
        %s149 = smul.u32 2, %s17
        %p150 = scmp.lt.s32.totalorder %s16, 1
        %s151 = scalar_select %p150, %s16, 1
        %p152 = scmp.lt.s32.totalorder %s149, 1
        %s153 = scalar_select %p152, %s149, 1
        %s154 = smul.addr %s151, 8
        %s155 = sadd.s32 %s153, %s154
        %s156 = smul.addr %s155, 8
        %s157 = scalar_lea.vmem %s0, %s156
        %s158 = smul.u32 2, %s17
      $region24: #{encoder_block2.5} parent=19 // pred_fallthru
        _
      // Predicated region
      $region25: #{encoder_block2.5} parent=19 // pred_check
        %p159 = pneg %p69
      $region26: #{encoder_block2.5} parent=19 // pred_check_branch
        %161 = sbr.rel (%p159) target = $region28
      $region27: #{encoder_block2.5} parent=19 // pred_region
        %p162 = scmp.lt.s32.totalorder %s16, 1
        %s163 = scalar_select %p162, %s16, 1
        %s164 = smul.addr %s163, 4
        %s165 = smul.addr %s164, 8
        %s166 = scalar_lea.vmem %s1, %s165
      $region28: #{encoder_block2.5} parent=19 // pred_fallthru
        _
    $region20: #{encoder_block2.5} parent=5 // pred_fallthru
      _
    %p167 = scmp.le.s32.totalorder 1, %s9
    %p168 = scmp.lt.s32.totalorder %s9, 3
    %p169 = pnand %p167, %p168
    %p170 = pneg %p169
    // Predicated region
    $region29: #{encoder_block2.5} parent=5 // pred_check
      _
    $region30: #{encoder_block2.5} parent=5 // pred_check_branch
      %172 = sbr.rel (%p169) target = $region32
    $region31: #{encoder_block2.5} parent=5 // pred_region
      %s173 = ssub.s32 %s9, 1
      %s174 = smul.u32 2, %s19
      %p175 = scmp.lt.s32.totalorder %s18, 1
      %s176 = scalar_select %p175, %s18, 1
      %p177 = scmp.lt.s32.totalorder %s174, 1
      %s178 = scalar_select %p177, %s174, 1
      %s179 = smul.addr %s176, 8
      %s180 = sadd.s32 %s178, %s179
      %s181 = smul.addr %s180, 8
      %s182 = scalar_lea.vmem %s0, %s181
      %p183 = pneg %p49
      %p184 = pneg %p46
      %p185 = scmp.lt.s32.totalorder %s18, 1
      %s186 = scalar_select %p185, %s18, 1
      %s187 = smul.addr %s186, 4
      %s188 = smul.addr %s187, 8
      %s189 = scalar_lea.vmem %s1, %s188
      %p190 = pneg %p75
      %p191 = pneg %p72
      %p192 = pneg %p96
      %p193 = pneg %p93
      %p194 = pneg %p124
      %p195 = pneg %p121
      %s196 = smul.u32 2, %s19
      %p197 = scmp.lt.s32.totalorder %s18, 1
      %s198 = scalar_select %p197, %s18, 1
      %p199 = scmp.lt.s32.totalorder %s196, 1
      %s200 = scalar_select %p199, %s196, 1
      %s201 = smul.addr %s198, 8
      %s202 = sadd.s32 %s200, %s201
      %s203 = smul.addr %s202, 8
      %s204 = scalar_lea.vmem %s3, %s203
      %s205 = smul.u32 2, %s19
      %p206 = scmp.lt.s32.totalorder %s18, 1
      %s207 = scalar_select %p206, %s18, 1
      %p208 = scmp.lt.s32.totalorder %s205, 1
      %s209 = scalar_select %p208, %s205, 1
      %s210 = smul.addr %s207, 8
      %s211 = sadd.s32 %s209, %s210
      %s212 = smul.addr %s211, 8
      %s213 = scalar_lea.vmem %s0, %s212
      %s214 = smul.u32 2, %s19
      %p215 = scmp.lt.s32.totalorder %s18, 1
      %s216 = scalar_select %p215, %s18, 1
      %s217 = smul.addr %s216, 4
      %s218 = smul.addr %s217, 8
      %s219 = scalar_lea.vmem %s1, %s218
      %s220 = smul.u32 2, %s19
      %p221 = scmp.lt.s32.totalorder %s18, 1
      %s222 = scalar_select %p221, %s18, 1
      %p223 = scmp.lt.s32.totalorder %s220, 1
      %s224 = scalar_select %p223, %s220, 1
      %s225 = smul.addr %s222, 8
      %s226 = sadd.s32 %s224, %s225
      %s227 = smul.addr %s226, 8
      %s228 = scalar_lea.vmem %s3, %s227
      %s229 = smul.u32 2, %s19
      %v230 = vld [vmem:[%s213] sm:$0xff]
      %v231 = vld [vmem:[%s213 + $0x8] sm:$0xff]
      %v232 = vld [vmem:[%s213 + $0x10] sm:$0xff]
      %v233 = vld [vmem:[%s213 + $0x18] sm:$0xff]
      %v234 = vld [vmem:[%s213 + $0x20] sm:$0xff]
      %v235 = vld [vmem:[%s213 + $0x28] sm:$0xff]
      %v236 = vld [vmem:[%s213 + $0x30] sm:$0xff]
      %v237 = vld [vmem:[%s213 + $0x38] sm:$0xff]
      %v238 = vld [vmem:[%s219] sm:$0xff]
      %v239 = vld [vmem:[%s219 + $0x8] sm:$0xff]
      %v240 = vld [vmem:[%s219 + $0x10] sm:$0xff]
      %v241 = vld [vmem:[%s219 + $0x18] sm:$0xff]
      %243 = vset.pattern.permute.xlu0 0
      %244 = vperm.xlu0 %243, %v238
      %v245 = vpop.permute.xlu0 %244
      %248 = vset.pattern.permute.xlu0 0
      %249 = vperm.xlu0 %248, %v239
      %v250 = vpop.permute.xlu0 %249
      %253 = vset.pattern.permute.xlu0 0
      %254 = vperm.xlu0 %253, %v240
      %v255 = vpop.permute.xlu0 %254
      %258 = vset.pattern.permute.xlu0 0
      %259 = vperm.xlu0 %258, %v241
      %v260 = vpop.permute.xlu0 %259
      %v262 = vmul.f32 %v230, %v245
      %v263 = vmul.f32 %v231, %v245
      %v264 = vmul.f32 %v232, %v250
      %v265 = vmul.f32 %v233, %v250
      %v266 = vmul.f32 %v234, %v255
      %v267 = vmul.f32 %v235, %v255
      %v268 = vmul.f32 %v236, %v260
      %v269 = vmul.f32 %v237, %v260
      %vm270 = vcmp.ge.f32.partialorder %v262, 0.0
      %vm271 = vcmp.ge.f32.partialorder %v263, 0.0
      %vm272 = vcmp.ge.f32.partialorder %v264, 0.0
      %vm273 = vcmp.ge.f32.partialorder %v265, 0.0
      %vm274 = vcmp.ge.f32.partialorder %v266, 0.0
      %vm275 = vcmp.ge.f32.partialorder %v267, 0.0
      %vm276 = vcmp.ge.f32.partialorder %v268, 0.0
      %vm277 = vcmp.ge.f32.partialorder %v269, 0.0
      %v278 = vld [vmem:[%s2] sm:$0xff]
      %v279 = vld [vmem:[%s2 + $0x8] sm:$0xff]
      %v280 = vld [vmem:[%s2 + $0x10] sm:$0xff]
      %v281 = vld [vmem:[%s2 + $0x18] sm:$0xff]
      %283 = vset.pattern.permute.xlu0 0
      %284 = vperm.xlu0 %283, %v278
      %v285 = vpop.permute.xlu0 %284
      %288 = vset.pattern.permute.xlu0 0
      %289 = vperm.xlu0 %288, %v279
      %v290 = vpop.permute.xlu0 %289
      %293 = vset.pattern.permute.xlu0 0
      %294 = vperm.xlu0 %293, %v280
      %v295 = vpop.permute.xlu0 %294
      %298 = vset.pattern.permute.xlu0 0
      %299 = vperm.xlu0 %298, %v281
      %v300 = vpop.permute.xlu0 %299
      %v302 = vmul.f32 %v285, %v262
      %v303 = vmul.f32 %v285, %v263
      %v304 = vmul.f32 %v290, %v264
      %v305 = vmul.f32 %v290, %v265
      %v306 = vmul.f32 %v295, %v266
      %v307 = vmul.f32 %v295, %v267
      %v308 = vmul.f32 %v300, %v268
      %v309 = vmul.f32 %v300, %v269
      %v310 = vsel %vm270, %v262, %v302
      %v311 = vsel %vm271, %v263, %v303
      %v312 = vsel %vm272, %v264, %v304
      %v313 = vsel %vm273, %v265, %v305
      %v314 = vsel %vm274, %v266, %v306
      %v315 = vsel %vm275, %v267, %v307
      %v316 = vsel %vm276, %v268, %v308
      %v317 = vsel %vm277, %v269, %v309
      %318 = vst [vmem:[%s228] sm:$0xff] %v310
      %319 = vst [vmem:[%s228 + $0x8] sm:$0xff] %v311
      %320 = vst [vmem:[%s228 + $0x10] sm:$0xff] %v312
      %321 = vst [vmem:[%s228 + $0x18] sm:$0xff] %v313
      %322 = vst [vmem:[%s228 + $0x20] sm:$0xff] %v314
      %323 = vst [vmem:[%s228 + $0x28] sm:$0xff] %v315
      %324 = vst [vmem:[%s228 + $0x30] sm:$0xff] %v316
      %325 = vst [vmem:[%s228 + $0x38] sm:$0xff] %v317
      %s326 = smul.u32 2, %s19
      %p327 = scmp.lt.s32.totalorder %s18, 1
      %s328 = scalar_select %p327, %s18, 1
      %p329 = scmp.lt.s32.totalorder %s326, 1
      %s330 = scalar_select %p329, %s326, 1
      %s331 = smul.addr %s328, 8
      %s332 = sadd.s32 %s330, %s331
      %s333 = smul.addr %s332, 8
      %s334 = scalar_lea.vmem %s3, %s333
      // Predicated region
      $region33: #{encoder_block2.5} parent=31 // pred_check
        %p335 = pneg %p121
      $region34: #{encoder_block2.5} parent=31 // pred_check_branch
        %337 = sbr.rel (%p335) target = $region36
      $region35: #{encoder_block2.5} parent=31 // pred_region
        %s338 = smul.u32 2, %s19
      $region36: #{encoder_block2.5} parent=31 // pred_fallthru
        _
    $region32: #{encoder_block2.5} parent=5 // pred_fallthru
      _
    %p339 = scmp.le.s32.totalorder 2, %s9
    // Predicated region
    $region37: #{encoder_block2.5} parent=5 // pred_check
      %p340 = pneg %p339
    $region38: #{encoder_block2.5} parent=5 // pred_check_branch
      %342 = sbr.rel (%p340) target = $region40
    $region39: #{encoder_block2.5} parent=5 // pred_region
      %s343 = ssub.s32 %s9, 2
      // Predicated region
      $region41: #{encoder_block2.5} parent=39 // pred_check
        %p344 = pneg %p127
      $region42: #{encoder_block2.5} parent=39 // pred_check_branch
        %346 = sbr.rel (%p344) target = $region44
      $region43: #{encoder_block2.5} parent=39 // pred_region
        %s347 = smul.u32 2, %s21
        %p348 = scmp.lt.s32.totalorder %s20, 1
        %s349 = scalar_select %p348, %s20, 1
        %p350 = scmp.lt.s32.totalorder %s347, 1
        %s351 = scalar_select %p350, %s347, 1
        %s352 = smul.addr %s349, 8
        %s353 = sadd.s32 %s351, %s352
        %s354 = smul.addr %s353, 8
        %s355 = scalar_lea.vmem %s3, %s354
      $region44: #{encoder_block2.5} parent=39 // pred_fallthru
        _
    $region40: #{encoder_block2.5} parent=5 // pred_fallthru
      _
  $region6: #{encoder_block2.5} parent=0 // loop_footer
    %s13 = sadd.s32 1, %s9
  $region7: #{encoder_block2.5} parent=0 // loop_footer_branch
    %8 = sbr.rel target = $region3
  $region8: #{encoder_block2.5} parent=0 // loop_exit
    _

</llo_original>
